<compile_context>
chip_gen: v7x
topology: tpu7x:2x2x1
jax: 0.10.0
libtpu: 0.0.40
codegen_flags: <defaults>
</compile_context>

<pallas_src>
import functools

import numpy as np
import jax
import jax.numpy as jnp
from jax.experimental import pallas as pl
from jax.experimental.pallas import tpu as pltpu

EPS = 1e-6          # same constant as im2mesh/layers_equi.py
CONV_DIM = 128      # conv_pos = VNLinearLeakyReLU(3, 128) is hard-coded in the module
NUM_BLOCKS = 5


def _vmem_limit_bytes(frac=0.75):
    """Generation-aware scoped-VMEM limit (~96 MiB on 128 MiB parts, ~48 MiB on v7x)."""
    try:
        cap = int(pltpu.get_tpu_info().vmem_capacity_bytes)
    except Exception:
        cap = 64 * 1024 * 1024          # conservative fallback (v7x physical VMEM)
    return max(int(cap * frac), 16 * 1024 * 1024)


def _row_tile(n, vmem_limit):
    """Largest 128-multiple row tile whose in-kernel (tile, N) temporaries fit."""
    budget = max(vmem_limit // 3, 4 * 1024 * 1024)
    for t in (2048, 1024, 512, 256, 128):
        if n % t == 0 and 3 * t * n * 4 <= budget:
            return t
    return n                            # full-extent block (small / odd N)


# ----------------------------------------------------------------------------
# Kernel 1: fused pairwise negative squared distance + top-k (knn), row-tiled.
# ----------------------------------------------------------------------------
def _knn_kernel(k, xr_ref, xt_ref, sqr_ref, sqc_ref, idx_ref):
    # -||xi - xj||^2 == 2 xi.xj - ||xi||^2 - ||xj||^2   (matches torch knn())
    inner = jax.lax.dot_general(xr_ref[0], xt_ref[0],
                                (((0,), (0,)), ((), ())),
                                preferred_element_type=jnp.float32)   # (TILE, N)
    neg = 2.0 * inner - sqr_ref[0] - sqc_ref[0]
    n = neg.shape[-1]
    pos = jax.lax.broadcasted_iota(jnp.int32, neg.shape, 1).astype(jnp.float32)
    picked = []
    d = neg
    for _ in range(k):                  # k is small and static: unrolled max + mask
        m = jnp.max(d, axis=-1, keepdims=True)
        sel = jnp.min(jnp.where(d >= m, pos, float(n)), axis=-1, keepdims=True)
        picked.append(sel)
        d = jnp.where(pos == sel, -jnp.inf, d)
    idx_ref[0] = jnp.concatenate(picked, axis=-1).astype(jnp.int32)


def knn_indices(points, k):
    """Fused pairwise-distance + top-k kernel.  (B, N, 3) -> (B, N, k) int32."""
    B, N, _ = points.shape
    x = points.astype(jnp.float32)
    xt = jnp.transpose(x, (0, 2, 1))                   # (B, 3, N), lane-dense
    sq = jnp.sum(x * x, axis=-1)                       # (B, N)
    vmem = _vmem_limit_bytes()
    tile = _row_tile(N, vmem)
    return pl.pallas_call(
        functools.partial(_knn_kernel, k),
        out_shape=jax.ShapeDtypeStruct((B, N, k), jnp.int32),
        grid_spec=pltpu.PrefetchScalarGridSpec(
            num_scalar_prefetch=0,
            grid=(B, N // tile),
            in_specs=[
                pl.BlockSpec((1, 3, tile), lambda b, r: (b, 0, r)),
                pl.BlockSpec((1, 3, N), lambda b, r: (b, 0, 0)),
                pl.BlockSpec((1, tile, 1), lambda b, r: (b, r, 0)),
                pl.BlockSpec((1, 1, N), lambda b, r: (b, 0, 0)),
            ],
            out_specs=pl.BlockSpec((1, tile, k), lambda b, r: (b, r, 0)),
        ),
        compiler_params=pltpu.CompilerParams(
            dimension_semantics=("parallel", "parallel"),
            vmem_limit_bytes=vmem,
        ),
    )(xt, xt, sq[:, :, None], sq[:, None, :])


# ----------------------------------------------------------------------------
# get_graph_feature_cross (glue): gather + cross product, vec folded into lanes.
# ----------------------------------------------------------------------------
def build_graph_feature(points, k):
    """Returns (feat, idx).  feat: (B, k, 3ch, 3*N) with the 3 vector components
    folded into the lane axis (lane = v*N + n).  idx: (B, N, k) knn indices."""
    B, N, _ = points.shape
    idx = knn_indices(points, k)                       # Pallas fused knn kernel
    # TODO(synk): the data-dependent neighbor gather has no clean Pallas TPU
    # equivalent (per-row DMA gather); it stays in plain JAX/XLA.
    flat = points.reshape(B * N, 3)
    idx_flat = (idx + (jnp.arange(B, dtype=idx.dtype) * N)[:, None, None]).reshape(-1)
    nbr = flat[idx_flat].reshape(B, N, k, 3)           # neighbor coordinates
    ctr = jnp.broadcast_to(points[:, :, None, :], nbr.shape)
    cross = jnp.cross(nbr, ctr, axis=-1)               # torch.cross(feature, x)
    feat = jnp.stack([nbr - ctr, ctr, cross], axis=3)  # (B, N, k, 3ch, 3vec)
    feat = jnp.transpose(feat, (0, 2, 3, 4, 1))        # (B, k, 3ch, 3vec, N)
    return feat.reshape(B, k, 3, 3 * N).astype(jnp.float32), idx


# ----------------------------------------------------------------------------
# Kernel 2: the full VN network, grid = (batch, neighbor), vec folded into lanes.
# ----------------------------------------------------------------------------
def _vnn_kernel(K, H, N, feat_ref, wcfd_ref, wfp_ref, wdsn_ref, wdsp_ref,
                wf0n_ref, wf0p_ref, wd1_ref, wf1_ref, wdc_ref, wfc_ref,
                out_ref, acc_ref):
    kstep = pl.program_id(1)
    bf16 = jnp.bfloat16
    H2 = 2 * H

    def mm(w, x):
        return jnp.dot(w, x, preferred_element_type=jnp.float32)

    def segs(a):                              # (C, 3N) -> 3 x (C, N) lane segments
        return [a[:, v * N:(v + 1) * N] for v in range(3)]

    def cols(a):                              # (C, 3)  -> 3 x (C, 1) columns
        return [a[:, v:v + 1] for v in range(3)]

    def fold(parts):
        return jnp.concatenate(parts, axis=-1)

    def leaky(xs, ds, out_dtype):
        # VNLeakyReLU (slope 0): keep x where <x, d> >= 0, else project x off d.
        # xs/ds are per-vec segments ((C,N) or broadcast (C,1)); dot/dsq/coef f32.
        dot = xs[0] * ds[0] + xs[1] * ds[1] + xs[2] * ds[2]
        dsq = ds[0] * ds[0] + ds[1] * ds[1] + ds[2] * ds[2]
        coef = dot * pl.reciprocal(dsq + EPS, approx=True)   # EUP, not a VPU divide
        neg = dot < 0.0
        return [jnp.where(neg, x - coef * d, x).astype(out_dtype)
                for x, d in zip(xs, ds)]

    # ---- conv_pos on this neighbor slab; running k-sum in VMEM scratch ----
    @pl.when(kstep == 0)
    def _():
        acc_ref[...] = jnp.zeros_like(acc_ref)

    feat = feat_ref[0, 0]                                     # (3 ch, 3N) f32
    pd = mm(wcfd_ref[...], feat)                              # (256, 3N): fused [feat; dir]
    act = leaky(segs(pd[:CONV_DIM]), segs(pd[CONV_DIM:]), jnp.float32)
    acc_ref[...] = acc_ref[...] + fold(act)

    # ---- trunk once the neighbor sum is complete (1/K folded into fc_pos) ----
    @pl.when(kstep == K - 1)
    def _():
        net_in = acc_ref[...].astype(bf16)                    # (128, 3N), cast once
        fp = mm(wfp_ref[...], net_in)                         # (2H, 3N) f32

        def pool_cols(x_f32):                                 # per-vec point mean
            return fold([jnp.mean(s, axis=-1, keepdims=True) for s in segs(x_f32)])

        def block(i, xt_f32, xb_f32=None, xb_col=None):
            # xt: "net" half (H, 3N).  xb: second half -- a full (H, 3N) slab for
            # block 0, or the pooled (H, 3) column for blocks 1..4; the 2H-wide
            # concatenated input is never materialized.
            xt_bf = xt_f32.astype(bf16)
            dn = mm(wdsn_ref[i], xt_bf)                       # (3H, 3N) f32
            if xb_col is None:
                xb_bf = xb_f32.astype(bf16)
                dall = dn + mm(wdsp_ref[i], xb_bf)            # (3H, 3N)
                d0t, d0b = segs(dall[:H]), segs(dall[H:H2])
                xsc = dall[H2:]                               # fused shortcut output
                xbs = segs(xb_bf)
            else:
                dp = mm(wdsp_ref[i], xb_col)                  # (3H, 3) column matmul
                d0t = [dn[:H, v * N:(v + 1) * N] + dp[:H, v:v + 1] for v in range(3)]
                d0b = [dn[H:H2, v * N:(v + 1) * N] + dp[H:H2, v:v + 1] for v in range(3)]
                xsc = fold([dn[H2:, v * N:(v + 1) * N] + dp[H2:, v:v + 1]
                            for v in range(3)])
                xbs = cols(xb_col)
            yt = fold(leaky(segs(xt_bf), d0t, bf16))          # (H, 3N) bf16
            yb = fold(leaky(xbs, d0b, bf16))                  # (H, 3N) bf16
            h = mm(wf0n_ref[i], yt) + mm(wf0p_ref[i], yb)     # (H, 3N) f32
            d1 = mm(wd1_ref[i], h.astype(bf16))               # (H, 3N) f32
            ha = fold(leaky(segs(h), segs(d1), bf16))         # (H, 3N) bf16
            dx = mm(wf1_ref[i], ha)                           # (H, 3N) f32
            return xsc + dx                                   # (H, 3N) f32

        # TODO(synk): for very large N on v7x (64 MiB VMEM) this single-pass trunk
        # should be N-chunked with a running pooled-column accumulator.
        net = block(0, fp[:H], xb_f32=fp[H:])
        for i in range(1, NUM_BLOCKS):
            net = block(i, net, xb_col=pool_cols(net).astype(bf16))

        # global point pooling + actvn_c + fc_c: tiny (H, 3) column math, f32.
        pooled = pool_cols(net)                               # (H, 3)
        dc = mm(wdc_ref[...], pooled)                         # (H, 3)
        y = fold(leaky(cols(pooled), cols(dc), jnp.float32))  # (H, 3)
        out_ref[0] = mm(wfc_ref[...], y)                      # (c_dim, 3)


def run_vnn_network(feat, packed, k):
    """feat: (B, k, 3ch, 3*N) folded graph features -> c: (B, c_dim, 3)."""
    B, K, _, lanes = feat.shape
    N = lanes // 3
    (wcfd, wfp, wdsn, wdsp, wf0n, wf0p, wd1, wf1, wdc, wfc) = packed
    H = wd1.shape[-1]
    c_dim = wfc.shape[0]

    def full_spec(a):
        zeros = (0,) * a.ndim
        return pl.BlockSpec(a.shape, lambda b, kk, _z=zeros: _z)

    kernel = functools.partial(_vnn_kernel, K, H, N)
    return pl.pallas_call(
        kernel,
        out_shape=jax.ShapeDtypeStruct((B, c_dim, 3), jnp.float32),
        grid_spec=pltpu.PrefetchScalarGridSpec(
            num_scalar_prefetch=0,
            grid=(B, K),                                      # k innermost: accumulation
            in_specs=[pl.BlockSpec((1, 1, 3, 3 * N), lambda b, kk: (b, kk, 0, 0))]
                     + [full_spec(w) for w in packed],
            out_specs=pl.BlockSpec((1, c_dim, 3), lambda b, kk: (b, 0, 0)),
            scratch_shapes=[pltpu.VMEM((CONV_DIM, 3 * N), jnp.float32)],
        ),
        compiler_params=pltpu.CompilerParams(
            dimension_semantics=("parallel", "arbitrary"),
            vmem_limit_bytes=_vmem_limit_bytes(),
        ),
    )(feat, *packed)


def vnn_resnet_pointnet(points, packed, k):
    """Forward pass of VNN_ResnetPointnet. points: (B, N, 3) -> c: (B, c_dim, 3)."""
    feat, _ = build_graph_feature(points, k)
    return run_vnn_network(feat, packed, k)


# ----------------------------------------------------------------------------
# Parameters: PyTorch (out, in) orientation, bias-free, then fused/split/packed.
# ----------------------------------------------------------------------------
def init_params(key, hidden_dim, c_dim, zero_init_fc1=False):
    H = hidden_dim
    shapes = {
        'conv_feat':   (CONV_DIM, 3),                # conv_pos.map_to_feat
        'conv_dir':    (CONV_DIM, 3),                # conv_pos.map_to_dir
        'fc_pos':      (2 * H, CONV_DIM),
        'blk_d0':      (NUM_BLOCKS, 2 * H, 2 * H),   # block_i.actvn_0.map_to_dir
        'blk_f0':      (NUM_BLOCKS, H, 2 * H),
        'blk_d1':      (NUM_BLOCKS, H, H),
        'blk_f1':      (NUM_BLOCKS, H, H),           # zero-init in the original module
        'blk_sc':      (NUM_BLOCKS, H, 2 * H),       # block_i.shortcut
        'actvn_c_dir': (H, H),
        'fc_c':        (c_dim, H),
    }
    keys = jax.random.split(key, len(shapes))
    params = {}
    for kk, (name, shape) in zip(keys, shapes.items()):
        fan_in = shape[-1]
        params[name] = jax.random.normal(kk, shape, jnp.float32) / np.sqrt(fan_in)
    if zero_init_fc1:
        # Matches PyTorch's nn.init.zeros_ on fc_1; the random default exercises
        # the fc_1 / actvn_1 path in the correctness check.
        params['blk_f1'] = jnp.zeros_like(params['blk_f1'])
    return params


def pack_params(params, k):
    H = params['blk_d1'].shape[-1]
    bf16 = jnp.bfloat16
    wcfd = jnp.concatenate([params['conv_feat'], params['conv_dir']], axis=0)   # (256, 3)
    wds = jnp.concatenate([params['blk_d0'], params['blk_sc']], axis=1)         # (5, 3H, 2H)
    return (
        wcfd.astype(jnp.float32),                    # conv_pos stays f32 (K=3, tiny)
        (params['fc_pos'] / float(k)).astype(bf16),  # 1/K neighbor-mean folded in
        wds[:, :, :H].astype(bf16),                  # columns acting on the "net" half
        wds[:, :, H:].astype(bf16),                  # columns acting on the pooled half
        params['blk_f0'][:, :, :H].astype(bf16),
        params['blk_f0'][:, :, H:].astype(bf16),
        params['blk_d1'].astype(bf16),
        params['blk_f1'].astype(bf16),
        params['actvn_c_dir'].astype(jnp.float32),
        params['fc_c'].astype(jnp.float32),
    )


# ----------------------------------------------------------------------------
# Pure-JAX reference mirroring the kernel's precision policy (bf16 MXU operands
# and bf16 trunk activations, f32 accumulation and VN math).
# ----------------------------------------------------------------------------
def reference_network(feat5, params, k):
    bf16 = jnp.bfloat16

    def leaky(x, d, axis, out_dtype=jnp.float32):
        dot = jnp.sum(x * d, axis=axis, keepdims=True)
        dsq = jnp.sum(d * d, axis=axis, keepdims=True)
        out = jnp.where(dot >= 0.0, x, x - (dot / (dsq + EPS)) * d)
        return out.astype(out_dtype)

    def lin32(w, x):
        return jnp.einsum('oc,...cvn->...ovn', w, x)

    def lin16(w, x):
        return jnp.einsum('oc,...cvn->...ovn', w.astype(bf16), x.astype(bf16),
                          preferred_element_type=jnp.float32)

    # conv_pos + neighbor sum (1/K is folded into fc_pos, as in the kernel).
    p = lin32(params['conv_feat'], feat5)              # (B, k, 128, 3, N)
    d = lin32(params['conv_dir'], feat5)
    net = jnp.sum(leaky(p, d, axis=3), axis=1)         # (B, 128, 3, N) f32

    x = lin16(params['fc_pos'] / float(k), net)        # (B, 2H, 3, N) f32

    def block(i, xin):                                 # xin: (B, 2H, 3, N) f32
        xin_bf = xin.astype(bf16)
        d0 = lin16(params['blk_d0'][i], xin_bf)
        xs = lin16(params['blk_sc'][i], xin_bf)
        y = leaky(xin_bf, d0, axis=2, out_dtype=bf16)
        h = lin16(params['blk_f0'][i], y)
        d1 = lin16(params['blk_d1'][i], h)
        ha = leaky(h, d1, axis=2, out_dtype=bf16)
        return xs + lin16(params['blk_f1'][i], ha)

    net = block(0, x)
    for i in range(1, NUM_BLOCKS):
        pooled = jnp.broadcast_to(jnp.mean(net, axis=-1, keepdims=True), net.shape)
        net = block(i, jnp.concatenate([net, pooled], axis=1))

    pooled = jnp.mean(net, axis=-1)                    # (B, H, 3)
    dc = jnp.einsum('oc,bcv->bov', params['actvn_c_dir'], pooled)
    dot = jnp.sum(pooled * dc, axis=2, keepdims=True)
    dsq = jnp.sum(dc * dc, axis=2, keepdims=True)
    y = jnp.where(dot >= 0.0, pooled, pooled - (dot / (dsq + EPS)) * dc)
    return jnp.einsum('oc,bcv->bov', params['fc_c'], y)   # (B, c_dim, 3)


if __name__ == "__main__":
    key = jax.random.PRNGKey(0)
    B, N, k = 2, 128, 8          # small demo shapes; N multiple of 128 (lane-aligned)
    hidden_dim, c_dim = 32, 16
    pkey, wkey = jax.random.split(key)
    points = jax.random.normal(pkey, (B, N, 3), jnp.float32)
    params = init_params(wkey, hidden_dim, c_dim)
    packed = pack_params(params, k)

    # --- fused knn kernel vs plain-JAX reference (tie / fp-order robust check) ---
    feat, idx = build_graph_feature(points, k)
    idx = jax.block_until_ready(idx)
    inner = jnp.einsum('bnd,bmd->bnm', points, points)
    xx = jnp.sum(points * points, axis=-1)
    neg_ref = 2.0 * inner - xx[:, :, None] - xx[:, None, :]
    vals_ref = jax.lax.top_k(neg_ref, k)[0]
    vals_sel = -jnp.sort(-jnp.take_along_axis(neg_ref, idx, axis=-1), axis=-1)
    np.testing.assert_allclose(np.asarray(vals_sel), np.asarray(vals_ref),
                               rtol=1e-4, atol=1e-4)

    # --- full encoder ---
    c = jax.block_until_ready(run_vnn_network(feat, packed, k))
    assert c.shape == (B, c_dim, 3)
    assert bool(jnp.all(jnp.isfinite(c)))

    # --- VN-network kernel vs the pure-JAX reference ---
    c_ref = reference_network(feat.reshape(B, k, 3, 3, N), params, k)
    np.testing.assert_allclose(np.asarray(c), np.asarray(c_ref), rtol=2e-2, atol=2e-2)

    print("KERNEL_OK")
</pallas_src>

<mosaic_0001>
module attributes {stable_mosaic.version = 11 : i64} {
  func.func @_knn_kernel(%arg0: i32, %arg1: i32, %arg2: memref<1x3x128xf32, #tpu.memory_space<vmem>>, %arg3: memref<1x3x128xf32, #tpu.memory_space<vmem>>, %arg4: memref<1x128x1xf32, #tpu.memory_space<vmem>>, %arg5: memref<1x1x128xf32, #tpu.memory_space<vmem>>, %arg6: memref<1x128x8xi32, #tpu.memory_space<vmem>>) attributes {dimension_semantics = [#tpu.dimension_semantics<parallel>, #tpu.dimension_semantics<parallel>], iteration_bounds = array<i64: 2, 1>, scalar_prefetch = 0 : i64, scratch_operands = 0 : i64, tpu.core_type = #tpu.core_type<tc>, window_params = [{transform_indices = @transform_0, window_bounds = array<i64: 1, 3, 128>}, {transform_indices = @transform_1, window_bounds = array<i64: 1, 3, 128>}, {transform_indices = @transform_2, window_bounds = array<i64: 1, 128, 1>}, {transform_indices = @transform_3, window_bounds = array<i64: 1, 1, 128>}, {transform_indices = @transform_4, window_bounds = array<i64: 1, 128, 8>}]} {
    %c0 = arith.constant 0 : index
    %c0_0 = arith.constant 0 : index
    %c0_1 = arith.constant 0 : index
    %0 = vector.load %arg2[%c0, %c0_0, %c0_1] : memref<1x3x128xf32, #tpu.memory_space<vmem>>, vector<1x3x128xf32>
    %1 = vector.shape_cast %0 : vector<1x3x128xf32> to vector<3x128xf32>
    %c0_2 = arith.constant 0 : index
    %c0_3 = arith.constant 0 : index
    %c0_4 = arith.constant 0 : index
    %2 = vector.load %arg3[%c0_2, %c0_3, %c0_4] : memref<1x3x128xf32, #tpu.memory_space<vmem>>, vector<1x3x128xf32>
    %3 = vector.shape_cast %2 : vector<1x3x128xf32> to vector<3x128xf32>
    %cst = arith.constant dense<0.000000e+00> : vector<128x128xf32>
    %4 = tpu.matmul %1, %3, %cst {dimension_numbers = #tpu.dot_dimension_numbers<[0], [0], [1], [1], [0, 1, 1, 1], [], []>} : vector<3x128xf32>, vector<3x128xf32>, vector<128x128xf32> -> vector<128x128xf32>
    %cst_5 = arith.constant 2.000000e+00 : f32
    %5 = vector.broadcast %cst_5 : f32 to vector<128x128xf32>
    %6 = arith.mulf %5, %4 : vector<128x128xf32>
    %c0_6 = arith.constant 0 : index
    %c0_7 = arith.constant 0 : index
    %c0_8 = arith.constant 0 : index
    %7 = vector.load %arg4[%c0_6, %c0_7, %c0_8] : memref<1x128x1xf32, #tpu.memory_space<vmem>>, vector<1x128x1xf32>
    %8 = vector.shape_cast %7 : vector<1x128x1xf32> to vector<128x1xf32>
    %9 = vector.broadcast %8 : vector<128x1xf32> to vector<128x128xf32>
    %10 = arith.subf %6, %9 : vector<128x128xf32>
    %c0_9 = arith.constant 0 : index
    %c0_10 = arith.constant 0 : index
    %c0_11 = arith.constant 0 : index
    %11 = vector.load %arg5[%c0_9, %c0_10, %c0_11] : memref<1x1x128xf32, #tpu.memory_space<vmem>>, vector<1x1x128xf32>
    %12 = vector.shape_cast %11 : vector<1x1x128xf32> to vector<1x128xf32>
    %13 = vector.broadcast %12 : vector<1x128xf32> to vector<128x128xf32>
    %14 = arith.subf %10, %13 : vector<128x128xf32>
    %15 = tpu.iota {dimensions = array<i32: 1>} : vector<128x128xi32>
    %16 = arith.sitofp %15 : vector<128x128xi32> to vector<128x128xf32>
    %cst_12 = arith.constant dense<0xFF800000> : vector<128xf32>
    %17 = vector.multi_reduction <maximumf>, %14, %cst_12 [1] : vector<128x128xf32> to vector<128xf32>
    %18 = vector.shape_cast %17 : vector<128xf32> to vector<128x1xf32>
    %19 = vector.broadcast %18 : vector<128x1xf32> to vector<128x128xf32>
    %20 = arith.cmpf oge, %14, %19 : vector<128x128xf32>
    %cst_13 = arith.constant 1.280000e+02 : f32
    %21 = vector.broadcast %cst_13 : f32 to vector<128x128xf32>
    %22 = arith.select %20, %16, %21 : vector<128x128xi1>, vector<128x128xf32>
    %cst_14 = arith.constant dense<0x7F800000> : vector<128xf32>
    %23 = vector.multi_reduction <minimumf>, %22, %cst_14 [1] : vector<128x128xf32> to vector<128xf32>
    %24 = vector.shape_cast %23 : vector<128xf32> to vector<128x1xf32>
    %25 = vector.broadcast %24 : vector<128x1xf32> to vector<128x128xf32>
    %26 = arith.cmpf oeq, %16, %25 : vector<128x128xf32>
    %cst_15 = arith.constant 0xFF800000 : f32
    %27 = vector.broadcast %cst_15 : f32 to vector<128x128xf32>
    %28 = arith.select %26, %27, %14 : vector<128x128xi1>, vector<128x128xf32>
    %cst_16 = arith.constant dense<0xFF800000> : vector<128xf32>
    %29 = vector.multi_reduction <maximumf>, %28, %cst_16 [1] : vector<128x128xf32> to vector<128xf32>
    %30 = vector.shape_cast %29 : vector<128xf32> to vector<128x1xf32>
    %31 = vector.broadcast %30 : vector<128x1xf32> to vector<128x128xf32>
    %32 = arith.cmpf oge, %28, %31 : vector<128x128xf32>
    %cst_17 = arith.constant 1.280000e+02 : f32
    %33 = vector.broadcast %cst_17 : f32 to vector<128x128xf32>
    %34 = arith.select %32, %16, %33 : vector<128x128xi1>, vector<128x128xf32>
    %cst_18 = arith.constant dense<0x7F800000> : vector<128xf32>
    %35 = vector.multi_reduction <minimumf>, %34, %cst_18 [1] : vector<128x128xf32> to vector<128xf32>
    %36 = vector.shape_cast %35 : vector<128xf32> to vector<128x1xf32>
    %37 = vector.broadcast %36 : vector<128x1xf32> to vector<128x128xf32>
    %38 = arith.cmpf oeq, %16, %37 : vector<128x128xf32>
    %cst_19 = arith.constant 0xFF800000 : f32
    %39 = vector.broadcast %cst_19 : f32 to vector<128x128xf32>
    %40 = arith.select %38, %39, %28 : vector<128x128xi1>, vector<128x128xf32>
    %cst_20 = arith.constant dense<0xFF800000> : vector<128xf32>
    %41 = vector.multi_reduction <maximumf>, %40, %cst_20 [1] : vector<128x128xf32> to vector<128xf32>
    %42 = vector.shape_cast %41 : vector<128xf32> to vector<128x1xf32>
    %43 = vector.broadcast %42 : vector<128x1xf32> to vector<128x128xf32>
    %44 = arith.cmpf oge, %40, %43 : vector<128x128xf32>
    %cst_21 = arith.constant 1.280000e+02 : f32
    %45 = vector.broadcast %cst_21 : f32 to vector<128x128xf32>
    %46 = arith.select %44, %16, %45 : vector<128x128xi1>, vector<128x128xf32>
    %cst_22 = arith.constant dense<0x7F800000> : vector<128xf32>
    %47 = vector.multi_reduction <minimumf>, %46, %cst_22 [1] : vector<128x128xf32> to vector<128xf32>
    %48 = vector.shape_cast %47 : vector<128xf32> to vector<128x1xf32>
    %49 = vector.broadcast %48 : vector<128x1xf32> to vector<128x128xf32>
    %50 = arith.cmpf oeq, %16, %49 : vector<128x128xf32>
    %cst_23 = arith.constant 0xFF800000 : f32
    %51 = vector.broadcast %cst_23 : f32 to vector<128x128xf32>
    %52 = arith.select %50, %51, %40 : vector<128x128xi1>, vector<128x128xf32>
    %cst_24 = arith.constant dense<0xFF800000> : vector<128xf32>
    %53 = vector.multi_reduction <maximumf>, %52, %cst_24 [1] : vector<128x128xf32> to vector<128xf32>
    %54 = vector.shape_cast %53 : vector<128xf32> to vector<128x1xf32>
    %55 = vector.broadcast %54 : vector<128x1xf32> to vector<128x128xf32>
    %56 = arith.cmpf oge, %52, %55 : vector<128x128xf32>
    %cst_25 = arith.constant 1.280000e+02 : f32
    %57 = vector.broadcast %cst_25 : f32 to vector<128x128xf32>
    %58 = arith.select %56, %16, %57 : vector<128x128xi1>, vector<128x128xf32>
    %cst_26 = arith.constant dense<0x7F800000> : vector<128xf32>
    %59 = vector.multi_reduction <minimumf>, %58, %cst_26 [1] : vector<128x128xf32> to vector<128xf32>
    %60 = vector.shape_cast %59 : vector<128xf32> to vector<128x1xf32>
    %61 = vector.broadcast %60 : vector<128x1xf32> to vector<128x128xf32>
    %62 = arith.cmpf oeq, %16, %61 : vector<128x128xf32>
    %cst_27 = arith.constant 0xFF800000 : f32
    %63 = vector.broadcast %cst_27 : f32 to vector<128x128xf32>
    %64 = arith.select %62, %63, %52 : vector<128x128xi1>, vector<128x128xf32>
    %cst_28 = arith.constant dense<0xFF800000> : vector<128xf32>
    %65 = vector.multi_reduction <maximumf>, %64, %cst_28 [1] : vector<128x128xf32> to vector<128xf32>
    %66 = vector.shape_cast %65 : vector<128xf32> to vector<128x1xf32>
    %67 = vector.broadcast %66 : vector<128x1xf32> to vector<128x128xf32>
    %68 = arith.cmpf oge, %64, %67 : vector<128x128xf32>
    %cst_29 = arith.constant 1.280000e+02 : f32
    %69 = vector.broadcast %cst_29 : f32 to vector<128x128xf32>
    %70 = arith.select %68, %16, %69 : vector<128x128xi1>, vector<128x128xf32>
    %cst_30 = arith.constant dense<0x7F800000> : vector<128xf32>
    %71 = vector.multi_reduction <minimumf>, %70, %cst_30 [1] : vector<128x128xf32> to vector<128xf32>
    %72 = vector.shape_cast %71 : vector<128xf32> to vector<128x1xf32>
    %73 = vector.broadcast %72 : vector<128x1xf32> to vector<128x128xf32>
    %74 = arith.cmpf oeq, %16, %73 : vector<128x128xf32>
    %cst_31 = arith.constant 0xFF800000 : f32
    %75 = vector.broadcast %cst_31 : f32 to vector<128x128xf32>
    %76 = arith.select %74, %75, %64 : vector<128x128xi1>, vector<128x128xf32>
    %cst_32 = arith.constant dense<0xFF800000> : vector<128xf32>
    %77 = vector.multi_reduction <maximumf>, %76, %cst_32 [1] : vector<128x128xf32> to vector<128xf32>
    %78 = vector.shape_cast %77 : vector<128xf32> to vector<128x1xf32>
    %79 = vector.broadcast %78 : vector<128x1xf32> to vector<128x128xf32>
    %80 = arith.cmpf oge, %76, %79 : vector<128x128xf32>
    %cst_33 = arith.constant 1.280000e+02 : f32
    %81 = vector.broadcast %cst_33 : f32 to vector<128x128xf32>
    %82 = arith.select %80, %16, %81 : vector<128x128xi1>, vector<128x128xf32>
    %cst_34 = arith.constant dense<0x7F800000> : vector<128xf32>
    %83 = vector.multi_reduction <minimumf>, %82, %cst_34 [1] : vector<128x128xf32> to vector<128xf32>
    %84 = vector.shape_cast %83 : vector<128xf32> to vector<128x1xf32>
    %85 = vector.broadcast %84 : vector<128x1xf32> to vector<128x128xf32>
    %86 = arith.cmpf oeq, %16, %85 : vector<128x128xf32>
    %cst_35 = arith.constant 0xFF800000 : f32
    %87 = vector.broadcast %cst_35 : f32 to vector<128x128xf32>
    %88 = arith.select %86, %87, %76 : vector<128x128xi1>, vector<128x128xf32>
    %cst_36 = arith.constant dense<0xFF800000> : vector<128xf32>
    %89 = vector.multi_reduction <maximumf>, %88, %cst_36 [1] : vector<128x128xf32> to vector<128xf32>
    %90 = vector.shape_cast %89 : vector<128xf32> to vector<128x1xf32>
    %91 = vector.broadcast %90 : vector<128x1xf32> to vector<128x128xf32>
    %92 = arith.cmpf oge, %88, %91 : vector<128x128xf32>
    %cst_37 = arith.constant 1.280000e+02 : f32
    %93 = vector.broadcast %cst_37 : f32 to vector<128x128xf32>
    %94 = arith.select %92, %16, %93 : vector<128x128xi1>, vector<128x128xf32>
    %cst_38 = arith.constant dense<0x7F800000> : vector<128xf32>
    %95 = vector.multi_reduction <minimumf>, %94, %cst_38 [1] : vector<128x128xf32> to vector<128xf32>
    %96 = vector.shape_cast %95 : vector<128xf32> to vector<128x1xf32>
    %97 = vector.broadcast %96 : vector<128x1xf32> to vector<128x128xf32>
    %98 = arith.cmpf oeq, %16, %97 : vector<128x128xf32>
    %cst_39 = arith.constant 0xFF800000 : f32
    %99 = vector.broadcast %cst_39 : f32 to vector<128x128xf32>
    %100 = arith.select %98, %99, %88 : vector<128x128xi1>, vector<128x128xf32>
    %cst_40 = arith.constant dense<0xFF800000> : vector<128xf32>
    %101 = vector.multi_reduction <maximumf>, %100, %cst_40 [1] : vector<128x128xf32> to vector<128xf32>
    %102 = vector.shape_cast %101 : vector<128xf32> to vector<128x1xf32>
    %103 = vector.broadcast %102 : vector<128x1xf32> to vector<128x128xf32>
    %104 = arith.cmpf oge, %100, %103 : vector<128x128xf32>
    %cst_41 = arith.constant 1.280000e+02 : f32
    %105 = vector.broadcast %cst_41 : f32 to vector<128x128xf32>
    %106 = arith.select %104, %16, %105 : vector<128x128xi1>, vector<128x128xf32>
    %cst_42 = arith.constant dense<0x7F800000> : vector<128xf32>
    %107 = vector.multi_reduction <minimumf>, %106, %cst_42 [1] : vector<128x128xf32> to vector<128xf32>
    %108 = vector.shape_cast %107 : vector<128xf32> to vector<128x1xf32>
    %109 = tpu.concatenate %24, %36, %48, %60, %72, %84, %96, %108 in 1 : vector<128x1xf32>, vector<128x1xf32>, vector<128x1xf32>, vector<128x1xf32>, vector<128x1xf32>, vector<128x1xf32>, vector<128x1xf32>, vector<128x1xf32> -> vector<128x8xf32>
    %110 = arith.fptosi %109 : vector<128x8xf32> to vector<128x8xi32>
    %c0_43 = arith.constant 0 : index
    %c0_44 = arith.constant 0 : index
    %c0_45 = arith.constant 0 : index
    %111 = vector.load %arg6[%c0_43, %c0_44, %c0_45] : memref<1x128x8xi32, #tpu.memory_space<vmem>>, vector<1x128x8xi32>
    %112 = vector.shape_cast %111 : vector<1x128x8xi32> to vector<128x8xi32>
    %113 = vector.shape_cast %110 : vector<128x8xi32> to vector<1x128x8xi32>
    tpu.vector_store %arg6[%c0_43, %c0_44, %c0_45], %113 {strides = array<i32>} : memref<1x128x8xi32, #tpu.memory_space<vmem>>, vector<1x128x8xi32>,
    return
  }
  func.func @transform_0(%arg0: i32, %arg1: i32) -> (i32, i32, i32) {
    %c0_i32 = arith.constant 0 : i32
    %c0_i32_0 = arith.constant 0 : i32
    return %arg0, %c0_i32, %arg1 : i32, i32, i32
  }
  func.func @transform_1(%arg0: i32, %arg1: i32) -> (i32, i32, i32) {
    %c0_i32 = arith.constant 0 : i32
    %c0_i32_0 = arith.constant 0 : i32
    %c0_i32_1 = arith.constant 0 : i32
    return %arg0, %c0_i32, %c0_i32_0 : i32, i32, i32
  }
  func.func @transform_2(%arg0: i32, %arg1: i32) -> (i32, i32, i32) {
    %c0_i32 = arith.constant 0 : i32
    %c0_i32_0 = arith.constant 0 : i32
    return %arg0, %arg1, %c0_i32 : i32, i32, i32
  }
  func.func @transform_3(%arg0: i32, %arg1: i32) -> (i32, i32, i32) {
    %c0_i32 = arith.constant 0 : i32
    %c0_i32_0 = arith.constant 0 : i32
    %c0_i32_1 = arith.constant 0 : i32
    return %arg0, %c0_i32, %c0_i32_0 : i32, i32, i32
  }
  func.func @transform_4(%arg0: i32, %arg1: i32) -> (i32, i32, i32) {
    %c0_i32 = arith.constant 0 : i32
    %c0_i32_0 = arith.constant 0 : i32
    return %arg0, %arg1, %c0_i32 : i32, i32, i32
  }
}

</mosaic_0001>

<llo_original>
// kernel: tpu_custom_call.1
$region0: #{tpu_custom_call.1}
  #allocation0 [shape = 'u32[]', space=smem, size = 0x4, offset = 0x4, fixed_abs, tag = 'smem constant byte address 0x4 - core index']
  #allocation1 [shape = 'u32[144,128]{1,0:T(1,128)}', space=vmem, size = 0x12000, scoped, tag = 'internal scratch']
  %s0 = inlined_call_operand.vmem [shape: f32[2,3,128], index: 0, kind: input, shape index: {}]
  %s1 = inlined_call_operand.vmem [shape: f32[2,3,128], index: 1, kind: input, shape index: {}]
  %s2 = inlined_call_operand.vmem [shape: f32[2,128,1], index: 2, kind: input, shape index: {}]
  %s3 = inlined_call_operand.vmem [shape: f32[2,1,128], index: 3, kind: input, shape index: {}]
  %s4 = inlined_call_operand.vmem [shape: s32[2,128,8], index: 4, kind: output, shape index: {}]
  %s5 = sld [smem:[#allocation0]]
  $region49: #{tpu_custom_call.1} parent=0
    _
  %s7 = ssub.s32 1, %s5
  %s8 = scalar_select 0, %s7, %s5
  loop: start=0, step=1, limit=4
  $region2: #{tpu_custom_call.1} parent=0 // loop_pre_header
    _
  $region3: #{tpu_custom_call.1} parent=0 // loop_header
    %s10 = sphi 0, %s14
    %p11 = scmp.ge.s32.totalorder %s10, 4
    %s17 = sphi 0, %s29
    %s18 = sphi 0, %s25
    %s19 = sphi 0, %s17
    %s20 = sphi 0, %s18
    %s21 = sphi 0, %s19
    %s22 = sphi 0, %s20
    %s34 = sphi 0, %s36
    %s37 = sphi 0, %s34
    %s38 = sphi 0, %s37
    %s54 = sphi 0, %s38
    %s60 = sphi 0, %s62
    %s63 = sphi 0, %s60
    %s64 = sphi 0, %s63
    %s80 = sphi 0, %s64
    %s88 = sphi 0, %s90
    %s91 = sphi 0, %s88
    %s92 = sphi 0, %s91
    %s108 = sphi 0, %s92
    %s114 = sphi 0, %s116
    %s117 = sphi 0, %s114
    %s118 = sphi 0, %s117
    %s134 = sphi 0, %s118
    %s142 = sphi 0, %s144
    %s145 = sphi 0, %s142
    %s146 = sphi 0, %s145
    %s162 = sphi 0, %s146
  $region4: #{tpu_custom_call.1} parent=0 // loop_header_branch
    %13 = sbr.rel (%p11) target = $region8
  $region5: #{tpu_custom_call.1} parent=0 // loop_body
    %s15 = ssub.s32 %s10, 1
    %s16 = ssub.s32 %s10, 2
    %s23 = sadd.s32 1, %s18
    %p24 = scmp.ge.s32.totalorder %s23, 1
    %s25 = scalar_select %p24, 0, %s23
    %s26 = sadd.s32 1, %s17
    %s27 = scalar_select %p24, %s26, %s17
    %p28 = scmp.ge.s32.totalorder %s27, 2
    %s29 = scalar_select %p28, 0, %s27
    %s30 = ssub.s32 %s17, %s29
    %s31 = ssub.s32 %s18, %s25
    %s32 = sor.u32 %s30, %s31
    %p33 = scmp.eq.s32.totalorder %s32, 0
    %s35 = sadd.s32 %s34, 1
    %s36 = scalar_select %p33, %s34, %s35
    %p39 = pneg %p33
    %p40 = scmp.eq.s32.totalorder %s10, 1
    %p41 = por %p39, %p40
    %p42 = scmp.ne.s32.totalorder %s34, %s37
    %p43 = scmp.eq.s32.totalorder %s10, 0
    %p44 = por %p42, %p43
    %p45 = scmp.ne.s32.totalorder %s34, %s37
    %p46 = scmp.eq.s32.totalorder %s15, 1
    %p47 = por %p45, %p46
    %p48 = scmp.ne.s32.totalorder %s37, %s38
    %p49 = scmp.eq.s32.totalorder %s15, 0
    %p50 = por %p48, %p49
    %p51 = scmp.ne.s32.totalorder %s37, %s38
    %p52 = scmp.eq.s32.totalorder %s16, 1
    %p53 = por %p51, %p52
    %p55 = scmp.ne.s32.totalorder %s38, %s54
    %p56 = scmp.eq.s32.totalorder %s16, 0
    %p57 = por %p55, %p56
    %s58 = ssub.s32 %s17, %s29
    %p59 = scmp.eq.s32.totalorder %s58, 0
    %s61 = sadd.s32 %s60, 1
    %s62 = scalar_select %p59, %s60, %s61
    %p65 = pneg %p59
    %p66 = scmp.eq.s32.totalorder %s10, 1
    %p67 = por %p65, %p66
    %p68 = scmp.ne.s32.totalorder %s60, %s63
    %p69 = scmp.eq.s32.totalorder %s10, 0
    %p70 = por %p68, %p69
    %p71 = scmp.ne.s32.totalorder %s60, %s63
    %p72 = scmp.eq.s32.totalorder %s15, 1
    %p73 = por %p71, %p72
    %p74 = scmp.ne.s32.totalorder %s63, %s64
    %p75 = scmp.eq.s32.totalorder %s15, 0
    %p76 = por %p74, %p75
    %p77 = scmp.ne.s32.totalorder %s63, %s64
    %p78 = scmp.eq.s32.totalorder %s16, 1
    %p79 = por %p77, %p78
    %p81 = scmp.ne.s32.totalorder %s64, %s80
    %p82 = scmp.eq.s32.totalorder %s16, 0
    %p83 = por %p81, %p82
    %s84 = ssub.s32 %s17, %s29
    %s85 = ssub.s32 %s18, %s25
    %s86 = sor.u32 %s84, %s85
    %p87 = scmp.eq.s32.totalorder %s86, 0
    %s89 = sadd.s32 %s88, 1
    %s90 = scalar_select %p87, %s88, %s89
    %p93 = pneg %p87
    %p94 = scmp.eq.s32.totalorder %s10, 1
    %p95 = por %p93, %p94
    %p96 = scmp.ne.s32.totalorder %s88, %s91
    %p97 = scmp.eq.s32.totalorder %s10, 0
    %p98 = por %p96, %p97
    %p99 = scmp.ne.s32.totalorder %s88, %s91
    %p100 = scmp.eq.s32.totalorder %s15, 1
    %p101 = por %p99, %p100
    %p102 = scmp.ne.s32.totalorder %s91, %s92
    %p103 = scmp.eq.s32.totalorder %s15, 0
    %p104 = por %p102, %p103
    %p105 = scmp.ne.s32.totalorder %s91, %s92
    %p106 = scmp.eq.s32.totalorder %s16, 1
    %p107 = por %p105, %p106
    %p109 = scmp.ne.s32.totalorder %s92, %s108
    %p110 = scmp.eq.s32.totalorder %s16, 0
    %p111 = por %p109, %p110
    %s112 = ssub.s32 %s17, %s29
    %p113 = scmp.eq.s32.totalorder %s112, 0
    %s115 = sadd.s32 %s114, 1
    %s116 = scalar_select %p113, %s114, %s115
    %p119 = pneg %p113
    %p120 = scmp.eq.s32.totalorder %s10, 1
    %p121 = por %p119, %p120
    %p122 = scmp.ne.s32.totalorder %s114, %s117
    %p123 = scmp.eq.s32.totalorder %s10, 0
    %p124 = por %p122, %p123
    %p125 = scmp.ne.s32.totalorder %s114, %s117
    %p126 = scmp.eq.s32.totalorder %s15, 1
    %p127 = por %p125, %p126
    %p128 = scmp.ne.s32.totalorder %s117, %s118
    %p129 = scmp.eq.s32.totalorder %s15, 0
    %p130 = por %p128, %p129
    %p131 = scmp.ne.s32.totalorder %s117, %s118
    %p132 = scmp.eq.s32.totalorder %s16, 1
    %p133 = por %p131, %p132
    %p135 = scmp.ne.s32.totalorder %s118, %s134
    %p136 = scmp.eq.s32.totalorder %s16, 0
    %p137 = por %p135, %p136
    %s138 = ssub.s32 %s17, %s29
    %s139 = ssub.s32 %s18, %s25
    %s140 = sor.u32 %s138, %s139
    %p141 = scmp.eq.s32.totalorder %s140, 0
    %s143 = sadd.s32 %s142, 1
    %s144 = scalar_select %p141, %s142, %s143
    %p147 = pneg %p141
    %p148 = scmp.eq.s32.totalorder %s10, 1
    %p149 = por %p147, %p148
    %p150 = scmp.ne.s32.totalorder %s142, %s145
    %p151 = scmp.eq.s32.totalorder %s10, 0
    %p152 = por %p150, %p151
    %p153 = scmp.ne.s32.totalorder %s142, %s145
    %p154 = scmp.eq.s32.totalorder %s15, 1
    %p155 = por %p153, %p154
    %p156 = scmp.ne.s32.totalorder %s145, %s146
    %p157 = scmp.eq.s32.totalorder %s15, 0
    %p158 = por %p156, %p157
    %p159 = scmp.ne.s32.totalorder %s145, %s146
    %p160 = scmp.eq.s32.totalorder %s16, 1
    %p161 = por %p159, %p160
    %p163 = scmp.ne.s32.totalorder %s146, %s162
    %p164 = scmp.eq.s32.totalorder %s16, 0
    %p165 = por %p163, %p164
    %p166 = scmp.le.s32.totalorder 1, %s10
    %p167 = scmp.lt.s32.totalorder %s10, 3
    %p168 = pnand %p166, %p167
    %p169 = pneg %p168
    // Predicated region
    $region9: #{tpu_custom_call.1} parent=5 // pred_check
      _
    $region10: #{tpu_custom_call.1} parent=5 // pred_check_branch
      %171 = sbr.rel (%p168) target = $region12
    $region11: #{tpu_custom_call.1} parent=5 // pred_region
      %s172 = ssub.s32 %s10, 1
    $region12: #{tpu_custom_call.1} parent=5 // pred_fallthru
      _
    %p173 = scmp.lt.s32.totalorder %s10, 2
    // Predicated region
    $region13: #{tpu_custom_call.1} parent=5 // pred_check
      %p174 = pneg %p173
    $region14: #{tpu_custom_call.1} parent=5 // pred_check_branch
      %176 = sbr.rel (%p174) target = $region16
    $region15: #{tpu_custom_call.1} parent=5 // pred_region
      // Predicated region
      $region17: #{tpu_custom_call.1} parent=15 // pred_check
        %p177 = pneg %p44
      $region18: #{tpu_custom_call.1} parent=15 // pred_check_branch
        %179 = sbr.rel (%p177) target = $region20
      $region19: #{tpu_custom_call.1} parent=15 // pred_region
        %p180 = scmp.lt.s32.totalorder %s17, 1
        %s181 = scalar_select %p180, %s17, 1
        %p182 = scmp.lt.s32.totalorder %s18, 0
        %s183 = scalar_select %p182, %s18, 0
        %s184 = sadd.s32 %s183, %s181
        %s185 = smul.addr %s184, 4
        %s186 = scalar_lea.vmem %s0, %s185
      $region20: #{tpu_custom_call.1} parent=15 // pred_fallthru
        _
      // Predicated region
      $region21: #{tpu_custom_call.1} parent=15 // pred_check
        %p187 = pneg %p70
      $region22: #{tpu_custom_call.1} parent=15 // pred_check_branch
        %189 = sbr.rel (%p187) target = $region24
      $region23: #{tpu_custom_call.1} parent=15 // pred_region
        %p190 = scmp.lt.s32.totalorder %s17, 1
        %s191 = scalar_select %p190, %s17, 1
        %s192 = smul.addr %s191, 4
        %s193 = scalar_lea.vmem %s1, %s192
      $region24: #{tpu_custom_call.1} parent=15 // pred_fallthru
        _
      // Predicated region
      $region25: #{tpu_custom_call.1} parent=15 // pred_check
        %p194 = pneg %p98
      $region26: #{tpu_custom_call.1} parent=15 // pred_check_branch
        %196 = sbr.rel (%p194) target = $region28
      $region27: #{tpu_custom_call.1} parent=15 // pred_region
        %s197 = smul.u32 16, %s18
        %p198 = scmp.lt.s32.totalorder %s17, 1
        %s199 = scalar_select %p198, %s17, 1
        %p200 = scmp.lt.s32.totalorder %s197, 15
        %s201 = scalar_select %p200, %s197, 15
        %s202 = smul.addr %s199, 16
        %s203 = sadd.s32 %s201, %s202
        %s204 = smul.addr %s203, 8
        %s205 = scalar_lea.vmem %s2, %s204
        %s206 = smul.u32 16, %s18
      $region28: #{tpu_custom_call.1} parent=15 // pred_fallthru
        _
      // Predicated region
      $region29: #{tpu_custom_call.1} parent=15 // pred_check
        %p207 = pneg %p124
      $region30: #{tpu_custom_call.1} parent=15 // pred_check_branch
        %209 = sbr.rel (%p207) target = $region32
      $region31: #{tpu_custom_call.1} parent=15 // pred_region
        %p210 = scmp.lt.s32.totalorder %s17, 1
        %s211 = scalar_select %p210, %s17, 1
        %s212 = scalar_lea.vmem %s3, %s211
      $region32: #{tpu_custom_call.1} parent=15 // pred_fallthru
        _
    $region16: #{tpu_custom_call.1} parent=5 // pred_fallthru
      _
    %p213 = scmp.le.s32.totalorder 1, %s10
    %p214 = scmp.lt.s32.totalorder %s10, 3
    %p215 = pnand %p213, %p214
    %p216 = pneg %p215
    // Predicated region
    $region33: #{tpu_custom_call.1} parent=5 // pred_check
      _
    $region34: #{tpu_custom_call.1} parent=5 // pred_check_branch
      %218 = sbr.rel (%p215) target = $region36
    $region35: #{tpu_custom_call.1} parent=5 // pred_region
      %s219 = ssub.s32 %s10, 1
      %p220 = scmp.lt.s32.totalorder %s19, 1
      %s221 = scalar_select %p220, %s19, 1
      %p222 = scmp.lt.s32.totalorder %s20, 0
      %s223 = scalar_select %p222, %s20, 0
      %s224 = sadd.s32 %s223, %s221
      %s225 = smul.addr %s224, 4
      %s226 = scalar_lea.vmem %s0, %s225
      %p227 = pneg %p50
      %p228 = pneg %p47
      %p229 = scmp.lt.s32.totalorder %s19, 1
      %s230 = scalar_select %p229, %s19, 1
      %s231 = smul.addr %s230, 4
      %s232 = scalar_lea.vmem %s1, %s231
      %p233 = pneg %p76
      %p234 = pneg %p73
      %s235 = smul.u32 16, %s20
      %p236 = scmp.lt.s32.totalorder %s19, 1
      %s237 = scalar_select %p236, %s19, 1
      %p238 = scmp.lt.s32.totalorder %s235, 15
      %s239 = scalar_select %p238, %s235, 15
      %s240 = smul.addr %s237, 16
      %s241 = sadd.s32 %s239, %s240
      %s242 = smul.addr %s241, 8
      %s243 = scalar_lea.vmem %s2, %s242
      %p244 = pneg %p104
      %p245 = pneg %p101
      %p246 = scmp.lt.s32.totalorder %s19, 1
      %s247 = scalar_select %p246, %s19, 1
      %s248 = scalar_lea.vmem %s3, %s247
      %p249 = pneg %p130
      %p250 = pneg %p127
      %p251 = pneg %p158
      %p252 = pneg %p155
      %s253 = smul.u32 16, %s20
      %p254 = scmp.lt.s32.totalorder %s19, 1
      %s255 = scalar_select %p254, %s19, 1
      %p256 = scmp.lt.s32.totalorder %s253, 15
      %s257 = scalar_select %p256, %s253, 15
      %s258 = smul.addr %s255, 16
      %s259 = sadd.s32 %s257, %s258
      %s260 = smul.addr %s259, 8
      %s261 = scalar_lea.vmem %s4, %s260
      %p262 = scmp.lt.s32.totalorder %s19, 1
      %s263 = scalar_select %p262, %s19, 1
      %p264 = scmp.lt.s32.totalorder %s20, 0
      %s265 = scalar_select %p264, %s20, 0
      %s266 = sadd.s32 %s265, %s263
      %s267 = smul.addr %s266, 4
      %s268 = scalar_lea.vmem %s0, %s267
      %p269 = scmp.lt.s32.totalorder %s19, 1
      %s270 = scalar_select %p269, %s19, 1
      %s271 = smul.addr %s270, 4
      %s272 = scalar_lea.vmem %s1, %s271
      %s273 = smul.u32 16, %s20
      %p274 = scmp.lt.s32.totalorder %s19, 1
      %s275 = scalar_select %p274, %s19, 1
      %p276 = scmp.lt.s32.totalorder %s273, 15
      %s277 = scalar_select %p276, %s273, 15
      %s278 = smul.addr %s275, 16
      %s279 = sadd.s32 %s277, %s278
      %s280 = smul.addr %s279, 8
      %s281 = scalar_lea.vmem %s2, %s280
      %s282 = smul.u32 16, %s20
      %p283 = scmp.lt.s32.totalorder %s19, 1
      %s284 = scalar_select %p283, %s19, 1
      %s285 = scalar_lea.vmem %s3, %s284
      %s286 = smul.u32 16, %s20
      %p287 = scmp.lt.s32.totalorder %s19, 1
      %s288 = scalar_select %p287, %s19, 1
      %p289 = scmp.lt.s32.totalorder %s286, 15
      %s290 = scalar_select %p289, %s286, 15
      %s291 = smul.addr %s288, 16
      %s292 = sadd.s32 %s290, %s291
      %s293 = smul.addr %s292, 8
      %s294 = scalar_lea.vmem %s4, %s293
      %s295 = smul.u32 16, %s20
      %v296 = vld [vmem:[%s268] sm:$0x7]
      %v297 = vld [vmem:[%s272] sm:$0x7]
      %298 = vxpose.xlu0.b32.start [1/16] %v296, 128
      %299 = vxpose.xlu0.b32.cont [2/16] 0.0, 128
      %300 = vxpose.xlu0.b32.cont [3/16] 0.0, 128
      %301 = vxpose.xlu0.b32.cont [4/16] 0.0, 128
      %302 = vxpose.xlu0.b32.cont [5/16] 0.0, 128
      %303 = vxpose.xlu0.b32.cont [6/16] 0.0, 128
      %304 = vxpose.xlu0.b32.cont [7/16] 0.0, 128
      %305 = vxpose.xlu0.b32.cont [8/16] 0.0, 128
      %306 = vxpose.xlu0.b32.cont [9/16] 0.0, 128
      %307 = vxpose.xlu0.b32.cont [10/16] 0.0, 128
      %308 = vxpose.xlu0.b32.cont [11/16] 0.0, 128
      %309 = vxpose.xlu0.b32.cont [12/16] 0.0, 128
      %310 = vxpose.xlu0.b32.cont [13/16] 0.0, 128
      %311 = vxpose.xlu0.b32.cont [14/16] 0.0, 128
      %312 = vxpose.xlu0.b32.cont [15/16] 0.0, 128
      %313 = vxpose.xlu0.b32.end [16/16] 0.0, 128
      %v314 = vpop.trf.xlu0
      %v315 = vpop.trf.xlu0
      %v316 = vpop.trf.xlu0
      %v317 = vpop.trf.xlu0
      %v318 = vpop.trf.xlu0
      %v319 = vpop.trf.xlu0
      %v320 = vpop.trf.xlu0
      %v321 = vpop.trf.xlu0
      %v322 = vpop.trf.xlu0
      %v323 = vpop.trf.xlu0
      %v324 = vpop.trf.xlu0
      %v325 = vpop.trf.xlu0
      %v326 = vpop.trf.xlu0
      %v327 = vpop.trf.xlu0
      %v328 = vpop.trf.xlu0
      %v329 = vpop.trf.xlu0
      %vm330 = vcmask 23552
      %v332 = vsel %vm330, %v314, 0
      %v335 = vsel %vm330, %v315, 0
      %v338 = vsel %vm330, %v316, 0
      %v341 = vsel %vm330, %v317, 0
      %v344 = vsel %vm330, %v318, 0
      %v347 = vsel %vm330, %v319, 0
      %v350 = vsel %vm330, %v320, 0
      %v353 = vsel %vm330, %v321, 0
      %v356 = vsel %vm330, %v322, 0
      %v359 = vsel %vm330, %v323, 0
      %v362 = vsel %vm330, %v324, 0
      %v365 = vsel %vm330, %v325, 0
      %v368 = vsel %vm330, %v326, 0
      %v371 = vsel %vm330, %v327, 0
      %v374 = vsel %vm330, %v328, 0
      %v377 = vsel %vm330, %v329, 0
      %vm379 = vcmask 1042432
      %v381 = vsel %vm379, %v297, 0
      %383 = vmatprep.subr.mxu0 0.0
      %384 = vmatpush1.msra.mxu0 %v381
      %385 = vmatprep.subr.mxu0 0.0
      %386 = vmatpush1.msra.mxu0 0.0
      %387 = vmatprep.subr.mxu0 0.0
      %388 = vmatpush1.msra.mxu0 0.0
      %389 = vmatprep.subr.mxu0 0.0
      %390 = vmatpush1.msra.mxu0 0.0
      %391 = vmatprep.subr.mxu0 0.0
      %392 = vmatpush1.msra.mxu0 0.0
      %393 = vmatprep.subr.mxu0 0.0
      %394 = vmatpush1.msra.mxu0 0.0
      %395 = vmatprep.subr.mxu0 0.0
      %396 = vmatpush1.msra.mxu0 0.0
      %397 = vmatprep.subr.mxu0 0.0
      %398 = vmatpush1.msra.mxu0 0.0
      %399 = vmatprep.subr.mxu0 0.0
      %400 = vmatpush1.msra.mxu0 0.0
      %401 = vmatprep.subr.mxu0 0.0
      %402 = vmatpush1.msra.mxu0 0.0
      %403 = vmatprep.subr.mxu0 0.0
      %404 = vmatpush1.msra.mxu0 0.0
      %405 = vmatprep.subr.mxu0 0.0
      %406 = vmatpush1.msra.mxu0 0.0
      %407 = vmatprep.subr.mxu0 0.0
      %408 = vmatpush1.msra.mxu0 0.0
      %409 = vmatprep.subr.mxu0 0.0
      %410 = vmatpush1.msra.mxu0 0.0
      %411 = vmatprep.subr.mxu0 0.0
      %412 = vmatpush1.msra.mxu0 0.0
      %413 = vmatprep.subr.mxu0 0.0
      %414 = vmatpush1.msra.mxu0 0.0
      %415 = vmatprep.subr.mxu0 0.0
      %416 = vmatpush1.msra.mxu0 0.0
      %417 = vmatprep.subr.mxu0 0.0
      %418 = vmatpush1.msra.mxu0 0.0
      %419 = vmatprep.subr.mxu0 0.0
      %420 = vmatpush1.msra.mxu0 0.0
      %421 = vmatprep.subr.mxu0 0.0
      %422 = vmatpush1.msra.mxu0 0.0
      %423 = vmatprep.subr.mxu0 0.0
      %424 = vmatpush1.msra.mxu0 0.0
      %425 = vmatprep.subr.mxu0 0.0
      %426 = vmatpush1.msra.mxu0 0.0
      %427 = vmatprep.subr.mxu0 0.0
      %428 = vmatpush1.msra.mxu0 0.0
      %429 = vmatprep.subr.mxu0 0.0
      %430 = vmatpush1.msra.mxu0 0.0
      %431 = vmatprep.subr.mxu0 0.0
      %432 = vmatpush1.msra.mxu0 0.0
      %433 = vmatprep.subr.mxu0 0.0
      %434 = vmatpush1.msra.mxu0 0.0
      %435 = vmatprep.subr.mxu0 0.0
      %436 = vmatpush1.msra.mxu0 0.0
      %437 = vmatprep.subr.mxu0 0.0
      %438 = vmatpush1.msra.mxu0 0.0
      %439 = vmatprep.subr.mxu0 0.0
      %440 = vmatpush1.msra.mxu0 0.0
      %441 = vmatprep.subr.mxu0 0.0
      %442 = vmatpush1.msra.mxu0 0.0
      %443 = vmatprep.subr.mxu0 0.0
      %444 = vmatpush1.msra.mxu0 0.0
      %445 = vmatprep.subr.mxu0 0.0
      %446 = vmatpush1.msra.mxu0 0.0
      %447 = vmatprep.mubr.f32.mxu0 0.0
      %448 = vmatmul.mubr.f32.gmra.mrb[0].mxu0 %v332
      %v449 = vpop.f32.mrb[0].mxu0
      %v450 = vadd.f32 0.0, %v449
      %v451 = vpop.f32.mrb[0].mxu0
      %452 = vmatprep.mubr.f32.mxu0 0.0
      %453 = vmatmul.mubr.f32.gmra.mrb[0].mxu0 %v335
      %v454 = vpop.f32.mrb[0].mxu0
      %v455 = vadd.f32 0.0, %v454
      %v456 = vpop.f32.mrb[0].mxu0
      %457 = vmatprep.mubr.f32.mxu0 0.0
      %458 = vmatmul.mubr.f32.gmra.mrb[0].mxu0 %v338
      %v459 = vpop.f32.mrb[0].mxu0
      %v460 = vadd.f32 0.0, %v459
      %v461 = vpop.f32.mrb[0].mxu0
      %462 = vmatprep.mubr.f32.mxu0 0.0
      %463 = vmatmul.mubr.f32.gmra.mrb[0].mxu0 %v341
      %v464 = vpop.f32.mrb[0].mxu0
      %v465 = vadd.f32 0.0, %v464
      %v466 = vpop.f32.mrb[0].mxu0
      %467 = vmatprep.mubr.f32.mxu0 0.0
      %468 = vmatmul.mubr.f32.gmra.mrb[0].mxu0 %v344
      %v469 = vpop.f32.mrb[0].mxu0
      %v470 = vadd.f32 0.0, %v469
      %v471 = vpop.f32.mrb[0].mxu0
      %472 = vmatprep.mubr.f32.mxu0 0.0
      %473 = vmatmul.mubr.f32.gmra.mrb[0].mxu0 %v347
      %v474 = vpop.f32.mrb[0].mxu0
      %v475 = vadd.f32 0.0, %v474
      %v476 = vpop.f32.mrb[0].mxu0
      %477 = vmatprep.mubr.f32.mxu0 0.0
      %478 = vmatmul.mubr.f32.gmra.mrb[0].mxu0 %v350
      %v479 = vpop.f32.mrb[0].mxu0
      %v480 = vadd.f32 0.0, %v479
      %v481 = vpop.f32.mrb[0].mxu0
      %482 = vmatprep.mubr.f32.mxu0 0.0
      %483 = vmatmul.mubr.f32.gmra.mrb[0].mxu0 %v353
      %v484 = vpop.f32.mrb[0].mxu0
      %v485 = vadd.f32 0.0, %v484
      %v486 = vpop.f32.mrb[0].mxu0
      %487 = vmatprep.mubr.f32.mxu0 0.0
      %488 = vmatmul.mubr.f32.gmra.mrb[0].mxu0 %v356
      %v489 = vpop.f32.mrb[0].mxu0
      %v490 = vadd.f32 0.0, %v489
      %v491 = vpop.f32.mrb[0].mxu0
      %492 = vmatprep.mubr.f32.mxu0 0.0
      %493 = vmatmul.mubr.f32.gmra.mrb[0].mxu0 %v359
      %v494 = vpop.f32.mrb[0].mxu0
      %v495 = vadd.f32 0.0, %v494
      %v496 = vpop.f32.mrb[0].mxu0
      %497 = vmatprep.mubr.f32.mxu0 0.0
      %498 = vmatmul.mubr.f32.gmra.mrb[0].mxu0 %v362
      %v499 = vpop.f32.mrb[0].mxu0
      %v500 = vadd.f32 0.0, %v499
      %v501 = vpop.f32.mrb[0].mxu0
      %502 = vmatprep.mubr.f32.mxu0 0.0
      %503 = vmatmul.mubr.f32.gmra.mrb[0].mxu0 %v365
      %v504 = vpop.f32.mrb[0].mxu0
      %v505 = vadd.f32 0.0, %v504
      %v506 = vpop.f32.mrb[0].mxu0
      %507 = vmatprep.mubr.f32.mxu0 0.0
      %508 = vmatmul.mubr.f32.gmra.mrb[0].mxu0 %v368
      %v509 = vpop.f32.mrb[0].mxu0
      %v510 = vadd.f32 0.0, %v509
      %v511 = vpop.f32.mrb[0].mxu0
      %512 = vmatprep.mubr.f32.mxu0 0.0
      %513 = vmatmul.mubr.f32.gmra.mrb[0].mxu0 %v371
      %v514 = vpop.f32.mrb[0].mxu0
      %v515 = vadd.f32 0.0, %v514
      %v516 = vpop.f32.mrb[0].mxu0
      %517 = vmatprep.mubr.f32.mxu0 0.0
      %518 = vmatmul.mubr.f32.gmra.mrb[0].mxu0 %v374
      %v519 = vpop.f32.mrb[0].mxu0
      %v520 = vadd.f32 0.0, %v519
      %v521 = vpop.f32.mrb[0].mxu0
      %522 = vmatprep.mubr.f32.mxu0 0.0
      %523 = vmatmul.mubr.f32.gmra.mrb[0].mxu0 %v377
      %v524 = vpop.f32.mrb[0].mxu0
      %v525 = vadd.f32 0.0, %v524
      %v526 = vpop.f32.mrb[0].mxu0
      %527 = vdwg.mxu0
      %v528 = vmul.f32 %v450, 2.0
      %v529 = vmul.f32 %v455, 2.0
      %v530 = vmul.f32 %v460, 2.0
      %v531 = vmul.f32 %v465, 2.0
      %v532 = vmul.f32 %v470, 2.0
      %v533 = vmul.f32 %v475, 2.0
      %v534 = vmul.f32 %v480, 2.0
      %v535 = vmul.f32 %v485, 2.0
      %v536 = vmul.f32 %v490, 2.0
      %v537 = vmul.f32 %v495, 2.0
      %v538 = vmul.f32 %v500, 2.0
      %v539 = vmul.f32 %v505, 2.0
      %v540 = vmul.f32 %v510, 2.0
      %v541 = vmul.f32 %v515, 2.0
      %v542 = vmul.f32 %v520, 2.0
      %v543 = vmul.f32 %v525, 2.0
      %v544 = vld [vmem:[%s281] sm:$0xff]
      %v545 = vld [vmem:[%s281 + $0x8] sm:$0xff]
      %v546 = vld [vmem:[%s281 + $0x10] sm:$0xff]
      %v547 = vld [vmem:[%s281 + $0x18] sm:$0xff]
      %v548 = vld [vmem:[%s281 + $0x20] sm:$0xff]
      %v549 = vld [vmem:[%s281 + $0x28] sm:$0xff]
      %v550 = vld [vmem:[%s281 + $0x30] sm:$0xff]
      %v551 = vld [vmem:[%s281 + $0x38] sm:$0xff]
      %v552 = vld [vmem:[%s281 + $0x40] sm:$0xff]
      %v553 = vld [vmem:[%s281 + $0x48] sm:$0xff]
      %v554 = vld [vmem:[%s281 + $0x50] sm:$0xff]
      %v555 = vld [vmem:[%s281 + $0x58] sm:$0xff]
      %v556 = vld [vmem:[%s281 + $0x60] sm:$0xff]
      %v557 = vld [vmem:[%s281 + $0x68] sm:$0xff]
      %v558 = vld [vmem:[%s281 + $0x70] sm:$0xff]
      %v559 = vld [vmem:[%s281 + $0x78] sm:$0xff]
      %561 = vset.pattern.permute.xlu0 0
      %562 = vperm.xlu0 %561, %v544
      %v563 = vpop.permute.xlu0 %562
      %566 = vset.pattern.permute.xlu0 0
      %567 = vperm.xlu0 %566, %v545
      %v568 = vpop.permute.xlu0 %567
      %571 = vset.pattern.permute.xlu0 0
      %572 = vperm.xlu0 %571, %v546
      %v573 = vpop.permute.xlu0 %572
      %576 = vset.pattern.permute.xlu0 0
      %577 = vperm.xlu0 %576, %v547
      %v578 = vpop.permute.xlu0 %577
      %581 = vset.pattern.permute.xlu0 0
      %582 = vperm.xlu0 %581, %v548
      %v583 = vpop.permute.xlu0 %582
      %586 = vset.pattern.permute.xlu0 0
      %587 = vperm.xlu0 %586, %v549
      %v588 = vpop.permute.xlu0 %587
      %591 = vset.pattern.permute.xlu0 0
      %592 = vperm.xlu0 %591, %v550
      %v593 = vpop.permute.xlu0 %592
      %596 = vset.pattern.permute.xlu0 0
      %597 = vperm.xlu0 %596, %v551
      %v598 = vpop.permute.xlu0 %597
      %601 = vset.pattern.permute.xlu0 0
      %602 = vperm.xlu0 %601, %v552
      %v603 = vpop.permute.xlu0 %602
      %606 = vset.pattern.permute.xlu0 0
      %607 = vperm.xlu0 %606, %v553
      %v608 = vpop.permute.xlu0 %607
      %611 = vset.pattern.permute.xlu0 0
      %612 = vperm.xlu0 %611, %v554
      %v613 = vpop.permute.xlu0 %612
      %616 = vset.pattern.permute.xlu0 0
      %617 = vperm.xlu0 %616, %v555
      %v618 = vpop.permute.xlu0 %617
      %621 = vset.pattern.permute.xlu0 0
      %622 = vperm.xlu0 %621, %v556
      %v623 = vpop.permute.xlu0 %622
      %626 = vset.pattern.permute.xlu0 0
      %627 = vperm.xlu0 %626, %v557
      %v628 = vpop.permute.xlu0 %627
      %631 = vset.pattern.permute.xlu0 0
      %632 = vperm.xlu0 %631, %v558
      %v633 = vpop.permute.xlu0 %632
      %636 = vset.pattern.permute.xlu0 0
      %637 = vperm.xlu0 %636, %v559
      %v638 = vpop.permute.xlu0 %637
      %v640 = vsub.f32 %v528, %v563
      %v641 = vsub.f32 %v529, %v568
      %v642 = vsub.f32 %v530, %v573
      %v643 = vsub.f32 %v531, %v578
      %v644 = vsub.f32 %v532, %v583
      %v645 = vsub.f32 %v533, %v588
      %v646 = vsub.f32 %v534, %v593
      %v647 = vsub.f32 %v535, %v598
      %v648 = vsub.f32 %v536, %v603
      %v649 = vsub.f32 %v537, %v608
      %v650 = vsub.f32 %v538, %v613
      %v651 = vsub.f32 %v539, %v618
      %v652 = vsub.f32 %v540, %v623
      %v653 = vsub.f32 %v541, %v628
      %v654 = vsub.f32 %v542, %v633
      %v655 = vsub.f32 %v543, %v638
      %v656 = vld [vmem:[%s285] sm:$0x1]
      %v658 = vlaneseq
      %v659 = vshrl.u32 %v658, 7
      %v660 = vsub.s32 0, %v659
      %v661 = vrot.slane %v656, %v660
      %v663 = vsub.f32 %v640, %v661
      %v664 = vsub.f32 %v641, %v661
      %v665 = vsub.f32 %v642, %v661
      %v666 = vsub.f32 %v643, %v661
      %v667 = vsub.f32 %v644, %v661
      %v668 = vsub.f32 %v645, %v661
      %v669 = vsub.f32 %v646, %v661
      %v670 = vsub.f32 %v647, %v661
      %v671 = vsub.f32 %v648, %v661
      %v672 = vsub.f32 %v649, %v661
      %v673 = vsub.f32 %v650, %v661
      %v674 = vsub.f32 %v651, %v661
      %v675 = vsub.f32 %v652, %v661
      %v676 = vsub.f32 %v653, %v661
      %v677 = vsub.f32 %v654, %v661
      %v678 = vsub.f32 %v655, %v661
      %v679 = vlaneseq
      %v680 = vand.u32 %v679, 127
      %v681 = vcvt.s32.f32 %v680
      %682 = vmax.xlane.f32.xlu0 %v663
      %v683 = vpop.xlane.xlu0 %682
      %684 = vmax.xlane.f32.xlu0 %v664
      %v685 = vpop.xlane.xlu0 %684
      %686 = vmax.xlane.f32.xlu0 %v665
      %v687 = vpop.xlane.xlu0 %686
      %688 = vmax.xlane.f32.xlu0 %v666
      %v689 = vpop.xlane.xlu0 %688
      %690 = vmax.xlane.f32.xlu0 %v667
      %v691 = vpop.xlane.xlu0 %690
      %692 = vmax.xlane.f32.xlu0 %v668
      %v693 = vpop.xlane.xlu0 %692
      %694 = vmax.xlane.f32.xlu0 %v669
      %v695 = vpop.xlane.xlu0 %694
      %696 = vmax.xlane.f32.xlu0 %v670
      %v697 = vpop.xlane.xlu0 %696
      %698 = vmax.xlane.f32.xlu0 %v671
      %v699 = vpop.xlane.xlu0 %698
      %700 = vmax.xlane.f32.xlu0 %v672
      %v701 = vpop.xlane.xlu0 %700
      %702 = vmax.xlane.f32.xlu0 %v673
      %v703 = vpop.xlane.xlu0 %702
      %704 = vmax.xlane.f32.xlu0 %v674
      %v705 = vpop.xlane.xlu0 %704
      %706 = vmax.xlane.f32.xlu0 %v675
      %v707 = vpop.xlane.xlu0 %706
      %708 = vmax.xlane.f32.xlu0 %v676
      %v709 = vpop.xlane.xlu0 %708
      %710 = vmax.xlane.f32.xlu0 %v677
      %v711 = vpop.xlane.xlu0 %710
      %712 = vmax.xlane.f32.xlu0 %v678
      %v713 = vpop.xlane.xlu0 %712
      %vm714 = vcmp.ge.f32.partialorder %v663, %v683
      %vm715 = vcmp.ge.f32.partialorder %v664, %v685
      %vm716 = vcmp.ge.f32.partialorder %v665, %v687
      %vm717 = vcmp.ge.f32.partialorder %v666, %v689
      %vm718 = vcmp.ge.f32.partialorder %v667, %v691
      %vm719 = vcmp.ge.f32.partialorder %v668, %v693
      %vm720 = vcmp.ge.f32.partialorder %v669, %v695
      %vm721 = vcmp.ge.f32.partialorder %v670, %v697
      %vm722 = vcmp.ge.f32.partialorder %v671, %v699
      %vm723 = vcmp.ge.f32.partialorder %v672, %v701
      %vm724 = vcmp.ge.f32.partialorder %v673, %v703
      %vm725 = vcmp.ge.f32.partialorder %v674, %v705
      %vm726 = vcmp.ge.f32.partialorder %v675, %v707
      %vm727 = vcmp.ge.f32.partialorder %v676, %v709
      %vm728 = vcmp.ge.f32.partialorder %v677, %v711
      %vm729 = vcmp.ge.f32.partialorder %v678, %v713
      %v730 = vsel %vm714, %v681, 128.0
      %v731 = vsel %vm715, %v681, 128.0
      %v732 = vsel %vm716, %v681, 128.0
      %v733 = vsel %vm717, %v681, 128.0
      %v734 = vsel %vm718, %v681, 128.0
      %v735 = vsel %vm719, %v681, 128.0
      %v736 = vsel %vm720, %v681, 128.0
      %v737 = vsel %vm721, %v681, 128.0
      %v738 = vsel %vm722, %v681, 128.0
      %v739 = vsel %vm723, %v681, 128.0
      %v740 = vsel %vm724, %v681, 128.0
      %v741 = vsel %vm725, %v681, 128.0
      %v742 = vsel %vm726, %v681, 128.0
      %v743 = vsel %vm727, %v681, 128.0
      %v744 = vsel %vm728, %v681, 128.0
      %v745 = vsel %vm729, %v681, 128.0
      %746 = vmin.xlane.f32.xlu0 %v730
      %v747 = vpop.xlane.xlu0 %746
      %748 = vmin.xlane.f32.xlu0 %v731
      %v749 = vpop.xlane.xlu0 %748
      %750 = vmin.xlane.f32.xlu0 %v732
      %v751 = vpop.xlane.xlu0 %750
      %752 = vmin.xlane.f32.xlu0 %v733
      %v753 = vpop.xlane.xlu0 %752
      %754 = vmin.xlane.f32.xlu0 %v734
      %v755 = vpop.xlane.xlu0 %754
      %756 = vmin.xlane.f32.xlu0 %v735
      %v757 = vpop.xlane.xlu0 %756
      %758 = vmin.xlane.f32.xlu0 %v736
      %v759 = vpop.xlane.xlu0 %758
      %760 = vmin.xlane.f32.xlu0 %v737
      %v761 = vpop.xlane.xlu0 %760
      %762 = vmin.xlane.f32.xlu0 %v738
      %v763 = vpop.xlane.xlu0 %762
      %764 = vmin.xlane.f32.xlu0 %v739
      %v765 = vpop.xlane.xlu0 %764
      %766 = vmin.xlane.f32.xlu0 %v740
      %v767 = vpop.xlane.xlu0 %766
      %768 = vmin.xlane.f32.xlu0 %v741
      %v769 = vpop.xlane.xlu0 %768
      %770 = vmin.xlane.f32.xlu0 %v742
      %v771 = vpop.xlane.xlu0 %770
      %772 = vmin.xlane.f32.xlu0 %v743
      %v773 = vpop.xlane.xlu0 %772
      %774 = vmin.xlane.f32.xlu0 %v744
      %v775 = vpop.xlane.xlu0 %774
      %776 = vmin.xlane.f32.xlu0 %v745
      %v777 = vpop.xlane.xlu0 %776
      %vm778 = vcmp.eq.f32.partialorder %v681, %v747
      %vm779 = vcmp.eq.f32.partialorder %v681, %v749
      %vm780 = vcmp.eq.f32.partialorder %v681, %v751
      %vm781 = vcmp.eq.f32.partialorder %v681, %v753
      %vm782 = vcmp.eq.f32.partialorder %v681, %v755
      %vm783 = vcmp.eq.f32.partialorder %v681, %v757
      %vm784 = vcmp.eq.f32.partialorder %v681, %v759
      %vm785 = vcmp.eq.f32.partialorder %v681, %v761
      %vm786 = vcmp.eq.f32.partialorder %v681, %v763
      %vm787 = vcmp.eq.f32.partialorder %v681, %v765
      %vm788 = vcmp.eq.f32.partialorder %v681, %v767
      %vm789 = vcmp.eq.f32.partialorder %v681, %v769
      %vm790 = vcmp.eq.f32.partialorder %v681, %v771
      %vm791 = vcmp.eq.f32.partialorder %v681, %v773
      %vm792 = vcmp.eq.f32.partialorder %v681, %v775
      %vm793 = vcmp.eq.f32.partialorder %v681, %v777
      %v794 = vsel %vm778, -inf, %v663
      %v795 = vsel %vm779, -inf, %v664
      %v796 = vsel %vm780, -inf, %v665
      %v797 = vsel %vm781, -inf, %v666
      %v798 = vsel %vm782, -inf, %v667
      %v799 = vsel %vm783, -inf, %v668
      %v800 = vsel %vm784, -inf, %v669
      %v801 = vsel %vm785, -inf, %v670
      %v802 = vsel %vm786, -inf, %v671
      %v803 = vsel %vm787, -inf, %v672
      %v804 = vsel %vm788, -inf, %v673
      %v805 = vsel %vm789, -inf, %v674
      %v806 = vsel %vm790, -inf, %v675
      %v807 = vsel %vm791, -inf, %v676
      %v808 = vsel %vm792, -inf, %v677
      %v809 = vsel %vm793, -inf, %v678
      %810 = vmax.xlane.f32.xlu0 %v794
      %v811 = vpop.xlane.xlu0 %810
      %812 = vmax.xlane.f32.xlu0 %v795
      %v813 = vpop.xlane.xlu0 %812
      %814 = vmax.xlane.f32.xlu0 %v796
      %v815 = vpop.xlane.xlu0 %814
      %816 = vmax.xlane.f32.xlu0 %v797
      %v817 = vpop.xlane.xlu0 %816
      %818 = vmax.xlane.f32.xlu0 %v798
      %v819 = vpop.xlane.xlu0 %818
      %820 = vmax.xlane.f32.xlu0 %v799
      %v821 = vpop.xlane.xlu0 %820
      %822 = vmax.xlane.f32.xlu0 %v800
      %v823 = vpop.xlane.xlu0 %822
      %824 = vmax.xlane.f32.xlu0 %v801
      %v825 = vpop.xlane.xlu0 %824
      %826 = vmax.xlane.f32.xlu0 %v802
      %v827 = vpop.xlane.xlu0 %826
      %828 = vmax.xlane.f32.xlu0 %v803
      %v829 = vpop.xlane.xlu0 %828
      %830 = vmax.xlane.f32.xlu0 %v804
      %v831 = vpop.xlane.xlu0 %830
      %832 = vmax.xlane.f32.xlu0 %v805
      %v833 = vpop.xlane.xlu0 %832
      %834 = vmax.xlane.f32.xlu0 %v806
      %v835 = vpop.xlane.xlu0 %834
      %836 = vmax.xlane.f32.xlu0 %v807
      %v837 = vpop.xlane.xlu0 %836
      %838 = vmax.xlane.f32.xlu0 %v808
      %v839 = vpop.xlane.xlu0 %838
      %840 = vmax.xlane.f32.xlu0 %v809
      %v841 = vpop.xlane.xlu0 %840
      %vm842 = vcmp.ge.f32.partialorder %v794, %v811
      %vm843 = vcmp.ge.f32.partialorder %v795, %v813
      %vm844 = vcmp.ge.f32.partialorder %v796, %v815
      %vm845 = vcmp.ge.f32.partialorder %v797, %v817
      %vm846 = vcmp.ge.f32.partialorder %v798, %v819
      %vm847 = vcmp.ge.f32.partialorder %v799, %v821
      %vm848 = vcmp.ge.f32.partialorder %v800, %v823
      %vm849 = vcmp.ge.f32.partialorder %v801, %v825
      %vm850 = vcmp.ge.f32.partialorder %v802, %v827
      %vm851 = vcmp.ge.f32.partialorder %v803, %v829
      %vm852 = vcmp.ge.f32.partialorder %v804, %v831
      %vm853 = vcmp.ge.f32.partialorder %v805, %v833
      %vm854 = vcmp.ge.f32.partialorder %v806, %v835
      %vm855 = vcmp.ge.f32.partialorder %v807, %v837
      %vm856 = vcmp.ge.f32.partialorder %v808, %v839
      %vm857 = vcmp.ge.f32.partialorder %v809, %v841
      %v858 = vsel %vm842, %v681, 128.0
      %v859 = vsel %vm843, %v681, 128.0
      %v860 = vsel %vm844, %v681, 128.0
      %v861 = vsel %vm845, %v681, 128.0
      %v862 = vsel %vm846, %v681, 128.0
      %v863 = vsel %vm847, %v681, 128.0
      %v864 = vsel %vm848, %v681, 128.0
      %v865 = vsel %vm849, %v681, 128.0
      %v866 = vsel %vm850, %v681, 128.0
      %v867 = vsel %vm851, %v681, 128.0
      %v868 = vsel %vm852, %v681, 128.0
      %v869 = vsel %vm853, %v681, 128.0
      %v870 = vsel %vm854, %v681, 128.0
      %v871 = vsel %vm855, %v681, 128.0
      %v872 = vsel %vm856, %v681, 128.0
      %v873 = vsel %vm857, %v681, 128.0
      %874 = vmin.xlane.f32.xlu0 %v858
      %v875 = vpop.xlane.xlu0 %874
      %876 = vmin.xlane.f32.xlu0 %v859
      %v877 = vpop.xlane.xlu0 %876
      %878 = vmin.xlane.f32.xlu0 %v860
      %v879 = vpop.xlane.xlu0 %878
      %880 = vmin.xlane.f32.xlu0 %v861
      %v881 = vpop.xlane.xlu0 %880
      %882 = vmin.xlane.f32.xlu0 %v862
      %v883 = vpop.xlane.xlu0 %882
      %884 = vmin.xlane.f32.xlu0 %v863
      %v885 = vpop.xlane.xlu0 %884
      %886 = vmin.xlane.f32.xlu0 %v864
      %v887 = vpop.xlane.xlu0 %886
      %888 = vmin.xlane.f32.xlu0 %v865
      %v889 = vpop.xlane.xlu0 %888
      %890 = vmin.xlane.f32.xlu0 %v866
      %v891 = vpop.xlane.xlu0 %890
      %892 = vmin.xlane.f32.xlu0 %v867
      %v893 = vpop.xlane.xlu0 %892
      %894 = vmin.xlane.f32.xlu0 %v868
      %v895 = vpop.xlane.xlu0 %894
      %896 = vmin.xlane.f32.xlu0 %v869
      %v897 = vpop.xlane.xlu0 %896
      %898 = vmin.xlane.f32.xlu0 %v870
      %v899 = vpop.xlane.xlu0 %898
      %900 = vmin.xlane.f32.xlu0 %v871
      %v901 = vpop.xlane.xlu0 %900
      %902 = vmin.xlane.f32.xlu0 %v872
      %v903 = vpop.xlane.xlu0 %902
      %904 = vmin.xlane.f32.xlu0 %v873
      %v905 = vpop.xlane.xlu0 %904
      %vm906 = vcmp.eq.f32.partialorder %v681, %v875
      %vm907 = vcmp.eq.f32.partialorder %v681, %v877
      %vm908 = vcmp.eq.f32.partialorder %v681, %v879
      %vm909 = vcmp.eq.f32.partialorder %v681, %v881
      %vm910 = vcmp.eq.f32.partialorder %v681, %v883
      %vm911 = vcmp.eq.f32.partialorder %v681, %v885
      %vm912 = vcmp.eq.f32.partialorder %v681, %v887
      %vm913 = vcmp.eq.f32.partialorder %v681, %v889
      %vm914 = vcmp.eq.f32.partialorder %v681, %v891
      %vm915 = vcmp.eq.f32.partialorder %v681, %v893
      %vm916 = vcmp.eq.f32.partialorder %v681, %v895
      %vm917 = vcmp.eq.f32.partialorder %v681, %v897
      %vm918 = vcmp.eq.f32.partialorder %v681, %v899
      %vm919 = vcmp.eq.f32.partialorder %v681, %v901
      %vm920 = vcmp.eq.f32.partialorder %v681, %v903
      %vm921 = vcmp.eq.f32.partialorder %v681, %v905
      %v922 = vsel %vm906, -inf, %v794
      %v923 = vsel %vm907, -inf, %v795
      %v924 = vsel %vm908, -inf, %v796
      %v925 = vsel %vm909, -inf, %v797
      %v926 = vsel %vm910, -inf, %v798
      %v927 = vsel %vm911, -inf, %v799
      %v928 = vsel %vm912, -inf, %v800
      %v929 = vsel %vm913, -inf, %v801
      %v930 = vsel %vm914, -inf, %v802
      %v931 = vsel %vm915, -inf, %v803
      %v932 = vsel %vm916, -inf, %v804
      %v933 = vsel %vm917, -inf, %v805
      %v934 = vsel %vm918, -inf, %v806
      %v935 = vsel %vm919, -inf, %v807
      %v936 = vsel %vm920, -inf, %v808
      %v937 = vsel %vm921, -inf, %v809
      %938 = vmax.xlane.f32.xlu0 %v922
      %v939 = vpop.xlane.xlu0 %938
      %940 = vmax.xlane.f32.xlu0 %v923
      %v941 = vpop.xlane.xlu0 %940
      %942 = vmax.xlane.f32.xlu0 %v924
      %v943 = vpop.xlane.xlu0 %942
      %944 = vmax.xlane.f32.xlu0 %v925
      %v945 = vpop.xlane.xlu0 %944
      %946 = vmax.xlane.f32.xlu0 %v926
      %v947 = vpop.xlane.xlu0 %946
      %948 = vmax.xlane.f32.xlu0 %v927
      %v949 = vpop.xlane.xlu0 %948
      %950 = vmax.xlane.f32.xlu0 %v928
      %v951 = vpop.xlane.xlu0 %950
      %952 = vmax.xlane.f32.xlu0 %v929
      %v953 = vpop.xlane.xlu0 %952
      %954 = vmax.xlane.f32.xlu0 %v930
      %v955 = vpop.xlane.xlu0 %954
      %956 = vmax.xlane.f32.xlu0 %v931
      %v957 = vpop.xlane.xlu0 %956
      %958 = vmax.xlane.f32.xlu0 %v932
      %v959 = vpop.xlane.xlu0 %958
      %960 = vmax.xlane.f32.xlu0 %v933
      %v961 = vpop.xlane.xlu0 %960
      %962 = vmax.xlane.f32.xlu0 %v934
      %v963 = vpop.xlane.xlu0 %962
      %964 = vmax.xlane.f32.xlu0 %v935
      %v965 = vpop.xlane.xlu0 %964
      %966 = vmax.xlane.f32.xlu0 %v936
      %v967 = vpop.xlane.xlu0 %966
      %968 = vmax.xlane.f32.xlu0 %v937
      %v969 = vpop.xlane.xlu0 %968
      %vm970 = vcmp.ge.f32.partialorder %v922, %v939
      %vm971 = vcmp.ge.f32.partialorder %v923, %v941
      %vm972 = vcmp.ge.f32.partialorder %v924, %v943
      %vm973 = vcmp.ge.f32.partialorder %v925, %v945
      %vm974 = vcmp.ge.f32.partialorder %v926, %v947
      %vm975 = vcmp.ge.f32.partialorder %v927, %v949
      %vm976 = vcmp.ge.f32.partialorder %v928, %v951
      %vm977 = vcmp.ge.f32.partialorder %v929, %v953
      %vm978 = vcmp.ge.f32.partialorder %v930, %v955
      %vm979 = vcmp.ge.f32.partialorder %v931, %v957
      %vm980 = vcmp.ge.f32.partialorder %v932, %v959
      %vm981 = vcmp.ge.f32.partialorder %v933, %v961
      %vm982 = vcmp.ge.f32.partialorder %v934, %v963
      %vm983 = vcmp.ge.f32.partialorder %v935, %v965
      %vm984 = vcmp.ge.f32.partialorder %v936, %v967
      %vm985 = vcmp.ge.f32.partialorder %v937, %v969
      %v986 = vsel %vm970, %v681, 128.0
      %v987 = vsel %vm971, %v681, 128.0
      %v988 = vsel %vm972, %v681, 128.0
      %v989 = vsel %vm973, %v681, 128.0
      %v990 = vsel %vm974, %v681, 128.0
      %v991 = vsel %vm975, %v681, 128.0
      %v992 = vsel %vm976, %v681, 128.0
      %v993 = vsel %vm977, %v681, 128.0
      %v994 = vsel %vm978, %v681, 128.0
      %v995 = vsel %vm979, %v681, 128.0
      %v996 = vsel %vm980, %v681, 128.0
      %v997 = vsel %vm981, %v681, 128.0
      %v998 = vsel %vm982, %v681, 128.0
      %v999 = vsel %vm983, %v681, 128.0
      %v1000 = vsel %vm984, %v681, 128.0
      %v1001 = vsel %vm985, %v681, 128.0
      %1002 = vmin.xlane.f32.xlu0 %v986
      %v1003 = vpop.xlane.xlu0 %1002
      %1004 = vmin.xlane.f32.xlu0 %v987
      %v1005 = vpop.xlane.xlu0 %1004
      %1006 = vmin.xlane.f32.xlu0 %v988
      %v1007 = vpop.xlane.xlu0 %1006
      %1008 = vmin.xlane.f32.xlu0 %v989
      %v1009 = vpop.xlane.xlu0 %1008
      %1010 = vmin.xlane.f32.xlu0 %v990
      %v1011 = vpop.xlane.xlu0 %1010
      %1012 = vmin.xlane.f32.xlu0 %v991
      %v1013 = vpop.xlane.xlu0 %1012
      %1014 = vmin.xlane.f32.xlu0 %v992
      %v1015 = vpop.xlane.xlu0 %1014
      %1016 = vmin.xlane.f32.xlu0 %v993
      %v1017 = vpop.xlane.xlu0 %1016
      %1018 = vmin.xlane.f32.xlu0 %v994
      %v1019 = vpop.xlane.xlu0 %1018
      %1020 = vmin.xlane.f32.xlu0 %v995
      %v1021 = vpop.xlane.xlu0 %1020
      %1022 = vmin.xlane.f32.xlu0 %v996
      %v1023 = vpop.xlane.xlu0 %1022
      %1024 = vmin.xlane.f32.xlu0 %v997
      %v1025 = vpop.xlane.xlu0 %1024
      %1026 = vmin.xlane.f32.xlu0 %v998
      %v1027 = vpop.xlane.xlu0 %1026
      %1028 = vmin.xlane.f32.xlu0 %v999
      %v1029 = vpop.xlane.xlu0 %1028
      %1030 = vmin.xlane.f32.xlu0 %v1000
      %v1031 = vpop.xlane.xlu0 %1030
      %1032 = vmin.xlane.f32.xlu0 %v1001
      %v1033 = vpop.xlane.xlu0 %1032
      %vm1034 = vcmp.eq.f32.partialorder %v681, %v1003
      %vm1035 = vcmp.eq.f32.partialorder %v681, %v1005
      %vm1036 = vcmp.eq.f32.partialorder %v681, %v1007
      %vm1037 = vcmp.eq.f32.partialorder %v681, %v1009
      %vm1038 = vcmp.eq.f32.partialorder %v681, %v1011
      %vm1039 = vcmp.eq.f32.partialorder %v681, %v1013
      %vm1040 = vcmp.eq.f32.partialorder %v681, %v1015
      %vm1041 = vcmp.eq.f32.partialorder %v681, %v1017
      %vm1042 = vcmp.eq.f32.partialorder %v681, %v1019
      %vm1043 = vcmp.eq.f32.partialorder %v681, %v1021
      %vm1044 = vcmp.eq.f32.partialorder %v681, %v1023
      %vm1045 = vcmp.eq.f32.partialorder %v681, %v1025
      %vm1046 = vcmp.eq.f32.partialorder %v681, %v1027
      %vm1047 = vcmp.eq.f32.partialorder %v681, %v1029
      %vm1048 = vcmp.eq.f32.partialorder %v681, %v1031
      %vm1049 = vcmp.eq.f32.partialorder %v681, %v1033
      %v1050 = vsel %vm1034, -inf, %v922
      %v1051 = vsel %vm1035, -inf, %v923
      %v1052 = vsel %vm1036, -inf, %v924
      %v1053 = vsel %vm1037, -inf, %v925
      %v1054 = vsel %vm1038, -inf, %v926
      %v1055 = vsel %vm1039, -inf, %v927
      %v1056 = vsel %vm1040, -inf, %v928
      %v1057 = vsel %vm1041, -inf, %v929
      %v1058 = vsel %vm1042, -inf, %v930
      %v1059 = vsel %vm1043, -inf, %v931
      %v1060 = vsel %vm1044, -inf, %v932
      %v1061 = vsel %vm1045, -inf, %v933
      %v1062 = vsel %vm1046, -inf, %v934
      %v1063 = vsel %vm1047, -inf, %v935
      %v1064 = vsel %vm1048, -inf, %v936
      %v1065 = vsel %vm1049, -inf, %v937
      %1066 = vmax.xlane.f32.xlu0 %v1050
      %v1067 = vpop.xlane.xlu0 %1066
      %1068 = vmax.xlane.f32.xlu0 %v1051
      %v1069 = vpop.xlane.xlu0 %1068
      %1070 = vmax.xlane.f32.xlu0 %v1052
      %v1071 = vpop.xlane.xlu0 %1070
      %1072 = vmax.xlane.f32.xlu0 %v1053
      %v1073 = vpop.xlane.xlu0 %1072
      %1074 = vmax.xlane.f32.xlu0 %v1054
      %v1075 = vpop.xlane.xlu0 %1074
      %1076 = vmax.xlane.f32.xlu0 %v1055
      %v1077 = vpop.xlane.xlu0 %1076
      %1078 = vmax.xlane.f32.xlu0 %v1056
      %v1079 = vpop.xlane.xlu0 %1078
      %1080 = vmax.xlane.f32.xlu0 %v1057
      %v1081 = vpop.xlane.xlu0 %1080
      %1082 = vmax.xlane.f32.xlu0 %v1058
      %v1083 = vpop.xlane.xlu0 %1082
      %1084 = vmax.xlane.f32.xlu0 %v1059
      %v1085 = vpop.xlane.xlu0 %1084
      %1086 = vmax.xlane.f32.xlu0 %v1060
      %v1087 = vpop.xlane.xlu0 %1086
      %1088 = vmax.xlane.f32.xlu0 %v1061
      %v1089 = vpop.xlane.xlu0 %1088
      %1090 = vmax.xlane.f32.xlu0 %v1062
      %v1091 = vpop.xlane.xlu0 %1090
      %1092 = vmax.xlane.f32.xlu0 %v1063
      %v1093 = vpop.xlane.xlu0 %1092
      %1094 = vmax.xlane.f32.xlu0 %v1064
      %v1095 = vpop.xlane.xlu0 %1094
      %1096 = vmax.xlane.f32.xlu0 %v1065
      %v1097 = vpop.xlane.xlu0 %1096
      %vm1098 = vcmp.ge.f32.partialorder %v1050, %v1067
      %vm1099 = vcmp.ge.f32.partialorder %v1051, %v1069
      %vm1100 = vcmp.ge.f32.partialorder %v1052, %v1071
      %vm1101 = vcmp.ge.f32.partialorder %v1053, %v1073
      %vm1102 = vcmp.ge.f32.partialorder %v1054, %v1075
      %vm1103 = vcmp.ge.f32.partialorder %v1055, %v1077
      %vm1104 = vcmp.ge.f32.partialorder %v1056, %v1079
      %vm1105 = vcmp.ge.f32.partialorder %v1057, %v1081
      %vm1106 = vcmp.ge.f32.partialorder %v1058, %v1083
      %vm1107 = vcmp.ge.f32.partialorder %v1059, %v1085
      %vm1108 = vcmp.ge.f32.partialorder %v1060, %v1087
      %vm1109 = vcmp.ge.f32.partialorder %v1061, %v1089
      %vm1110 = vcmp.ge.f32.partialorder %v1062, %v1091
      %vm1111 = vcmp.ge.f32.partialorder %v1063, %v1093
      %vm1112 = vcmp.ge.f32.partialorder %v1064, %v1095
      %vm1113 = vcmp.ge.f32.partialorder %v1065, %v1097
      %v1114 = vsel %vm1098, %v681, 128.0
      %v1115 = vsel %vm1099, %v681, 128.0
      %v1116 = vsel %vm1100, %v681, 128.0
      %v1117 = vsel %vm1101, %v681, 128.0
      %v1118 = vsel %vm1102, %v681, 128.0
      %v1119 = vsel %vm1103, %v681, 128.0
      %v1120 = vsel %vm1104, %v681, 128.0
      %v1121 = vsel %vm1105, %v681, 128.0
      %v1122 = vsel %vm1106, %v681, 128.0
      %v1123 = vsel %vm1107, %v681, 128.0
      %v1124 = vsel %vm1108, %v681, 128.0
      %v1125 = vsel %vm1109, %v681, 128.0
      %v1126 = vsel %vm1110, %v681, 128.0
      %v1127 = vsel %vm1111, %v681, 128.0
      %v1128 = vsel %vm1112, %v681, 128.0
      %v1129 = vsel %vm1113, %v681, 128.0
      %1130 = vmin.xlane.f32.xlu0 %v1114
      %v1131 = vpop.xlane.xlu0 %1130
      %1132 = vmin.xlane.f32.xlu0 %v1115
      %v1133 = vpop.xlane.xlu0 %1132
      %1134 = vmin.xlane.f32.xlu0 %v1116
      %v1135 = vpop.xlane.xlu0 %1134
      %1136 = vmin.xlane.f32.xlu0 %v1117
      %v1137 = vpop.xlane.xlu0 %1136
      %1138 = vmin.xlane.f32.xlu0 %v1118
      %v1139 = vpop.xlane.xlu0 %1138
      %1140 = vmin.xlane.f32.xlu0 %v1119
      %v1141 = vpop.xlane.xlu0 %1140
      %1142 = vmin.xlane.f32.xlu0 %v1120
      %v1143 = vpop.xlane.xlu0 %1142
      %1144 = vmin.xlane.f32.xlu0 %v1121
      %v1145 = vpop.xlane.xlu0 %1144
      %1146 = vmin.xlane.f32.xlu0 %v1122
      %v1147 = vpop.xlane.xlu0 %1146
      %1148 = vmin.xlane.f32.xlu0 %v1123
      %v1149 = vpop.xlane.xlu0 %1148
      %1150 = vmin.xlane.f32.xlu0 %v1124
      %v1151 = vpop.xlane.xlu0 %1150
      %1152 = vmin.xlane.f32.xlu0 %v1125
      %v1153 = vpop.xlane.xlu0 %1152
      %1154 = vmin.xlane.f32.xlu0 %v1126
      %v1155 = vpop.xlane.xlu0 %1154
      %1156 = vmin.xlane.f32.xlu0 %v1127
      %v1157 = vpop.xlane.xlu0 %1156
      %1158 = vmin.xlane.f32.xlu0 %v1128
      %v1159 = vpop.xlane.xlu0 %1158
      %1160 = vmin.xlane.f32.xlu0 %v1129
      %v1161 = vpop.xlane.xlu0 %1160
      %vm1162 = vcmp.eq.f32.partialorder %v681, %v1131
      %vm1163 = vcmp.eq.f32.partialorder %v681, %v1133
      %vm1164 = vcmp.eq.f32.partialorder %v681, %v1135
      %vm1165 = vcmp.eq.f32.partialorder %v681, %v1137
      %vm1166 = vcmp.eq.f32.partialorder %v681, %v1139
      %vm1167 = vcmp.eq.f32.partialorder %v681, %v1141
      %vm1168 = vcmp.eq.f32.partialorder %v681, %v1143
      %vm1169 = vcmp.eq.f32.partialorder %v681, %v1145
      %vm1170 = vcmp.eq.f32.partialorder %v681, %v1147
      %vm1171 = vcmp.eq.f32.partialorder %v681, %v1149
      %vm1172 = vcmp.eq.f32.partialorder %v681, %v1151
      %vm1173 = vcmp.eq.f32.partialorder %v681, %v1153
      %vm1174 = vcmp.eq.f32.partialorder %v681, %v1155
      %vm1175 = vcmp.eq.f32.partialorder %v681, %v1157
      %vm1176 = vcmp.eq.f32.partialorder %v681, %v1159
      %vm1177 = vcmp.eq.f32.partialorder %v681, %v1161
      %v1178 = vsel %vm1162, -inf, %v1050
      %v1179 = vsel %vm1163, -inf, %v1051
      %v1180 = vsel %vm1164, -inf, %v1052
      %v1181 = vsel %vm1165, -inf, %v1053
      %v1182 = vsel %vm1166, -inf, %v1054
      %v1183 = vsel %vm1167, -inf, %v1055
      %v1184 = vsel %vm1168, -inf, %v1056
      %v1185 = vsel %vm1169, -inf, %v1057
      %v1186 = vsel %vm1170, -inf, %v1058
      %v1187 = vsel %vm1171, -inf, %v1059
      %v1188 = vsel %vm1172, -inf, %v1060
      %v1189 = vsel %vm1173, -inf, %v1061
      %v1190 = vsel %vm1174, -inf, %v1062
      %v1191 = vsel %vm1175, -inf, %v1063
      %v1192 = vsel %vm1176, -inf, %v1064
      %v1193 = vsel %vm1177, -inf, %v1065
      %1194 = vmax.xlane.f32.xlu0 %v1178
      %v1195 = vpop.xlane.xlu0 %1194
      %1196 = vmax.xlane.f32.xlu0 %v1179
      %v1197 = vpop.xlane.xlu0 %1196
      %1198 = vmax.xlane.f32.xlu0 %v1180
      %v1199 = vpop.xlane.xlu0 %1198
      %1200 = vmax.xlane.f32.xlu0 %v1181
      %v1201 = vpop.xlane.xlu0 %1200
      %1202 = vmax.xlane.f32.xlu0 %v1182
      %v1203 = vpop.xlane.xlu0 %1202
      %1204 = vmax.xlane.f32.xlu0 %v1183
      %v1205 = vpop.xlane.xlu0 %1204
      %1206 = vmax.xlane.f32.xlu0 %v1184
      %v1207 = vpop.xlane.xlu0 %1206
      %1208 = vmax.xlane.f32.xlu0 %v1185
      %v1209 = vpop.xlane.xlu0 %1208
      %1210 = vmax.xlane.f32.xlu0 %v1186
      %v1211 = vpop.xlane.xlu0 %1210
      %1212 = vmax.xlane.f32.xlu0 %v1187
      %v1213 = vpop.xlane.xlu0 %1212
      %1214 = vmax.xlane.f32.xlu0 %v1188
      %v1215 = vpop.xlane.xlu0 %1214
      %1216 = vmax.xlane.f32.xlu0 %v1189
      %v1217 = vpop.xlane.xlu0 %1216
      %1218 = vmax.xlane.f32.xlu0 %v1190
      %v1219 = vpop.xlane.xlu0 %1218
      %1220 = vmax.xlane.f32.xlu0 %v1191
      %v1221 = vpop.xlane.xlu0 %1220
      %1222 = vmax.xlane.f32.xlu0 %v1192
      %v1223 = vpop.xlane.xlu0 %1222
      %1224 = vmax.xlane.f32.xlu0 %v1193
      %v1225 = vpop.xlane.xlu0 %1224
      %vm1226 = vcmp.ge.f32.partialorder %v1178, %v1195
      %vm1227 = vcmp.ge.f32.partialorder %v1179, %v1197
      %vm1228 = vcmp.ge.f32.partialorder %v1180, %v1199
      %vm1229 = vcmp.ge.f32.partialorder %v1181, %v1201
      %vm1230 = vcmp.ge.f32.partialorder %v1182, %v1203
      %vm1231 = vcmp.ge.f32.partialorder %v1183, %v1205
      %vm1232 = vcmp.ge.f32.partialorder %v1184, %v1207
      %vm1233 = vcmp.ge.f32.partialorder %v1185, %v1209
      %vm1234 = vcmp.ge.f32.partialorder %v1186, %v1211
      %vm1235 = vcmp.ge.f32.partialorder %v1187, %v1213
      %vm1236 = vcmp.ge.f32.partialorder %v1188, %v1215
      %vm1237 = vcmp.ge.f32.partialorder %v1189, %v1217
      %vm1238 = vcmp.ge.f32.partialorder %v1190, %v1219
      %vm1239 = vcmp.ge.f32.partialorder %v1191, %v1221
      %vm1240 = vcmp.ge.f32.partialorder %v1192, %v1223
      %vm1241 = vcmp.ge.f32.partialorder %v1193, %v1225
      %v1242 = vsel %vm1226, %v681, 128.0
      %v1243 = vsel %vm1227, %v681, 128.0
      %v1244 = vsel %vm1228, %v681, 128.0
      %v1245 = vsel %vm1229, %v681, 128.0
      %v1246 = vsel %vm1230, %v681, 128.0
      %v1247 = vsel %vm1231, %v681, 128.0
      %v1248 = vsel %vm1232, %v681, 128.0
      %v1249 = vsel %vm1233, %v681, 128.0
      %v1250 = vsel %vm1234, %v681, 128.0
      %v1251 = vsel %vm1235, %v681, 128.0
      %v1252 = vsel %vm1236, %v681, 128.0
      %v1253 = vsel %vm1237, %v681, 128.0
      %v1254 = vsel %vm1238, %v681, 128.0
      %v1255 = vsel %vm1239, %v681, 128.0
      %v1256 = vsel %vm1240, %v681, 128.0
      %v1257 = vsel %vm1241, %v681, 128.0
      %1258 = vmin.xlane.f32.xlu0 %v1242
      %v1259 = vpop.xlane.xlu0 %1258
      %1260 = vmin.xlane.f32.xlu0 %v1243
      %v1261 = vpop.xlane.xlu0 %1260
      %1262 = vmin.xlane.f32.xlu0 %v1244
      %v1263 = vpop.xlane.xlu0 %1262
      %1264 = vmin.xlane.f32.xlu0 %v1245
      %v1265 = vpop.xlane.xlu0 %1264
      %1266 = vmin.xlane.f32.xlu0 %v1246
      %v1267 = vpop.xlane.xlu0 %1266
      %1268 = vmin.xlane.f32.xlu0 %v1247
      %v1269 = vpop.xlane.xlu0 %1268
      %1270 = vmin.xlane.f32.xlu0 %v1248
      %v1271 = vpop.xlane.xlu0 %1270
      %1272 = vmin.xlane.f32.xlu0 %v1249
      %v1273 = vpop.xlane.xlu0 %1272
      %1274 = vmin.xlane.f32.xlu0 %v1250
      %v1275 = vpop.xlane.xlu0 %1274
      %1276 = vmin.xlane.f32.xlu0 %v1251
      %v1277 = vpop.xlane.xlu0 %1276
      %1278 = vmin.xlane.f32.xlu0 %v1252
      %v1279 = vpop.xlane.xlu0 %1278
      %1280 = vmin.xlane.f32.xlu0 %v1253
      %v1281 = vpop.xlane.xlu0 %1280
      %1282 = vmin.xlane.f32.xlu0 %v1254
      %v1283 = vpop.xlane.xlu0 %1282
      %1284 = vmin.xlane.f32.xlu0 %v1255
      %v1285 = vpop.xlane.xlu0 %1284
      %1286 = vmin.xlane.f32.xlu0 %v1256
      %v1287 = vpop.xlane.xlu0 %1286
      %1288 = vmin.xlane.f32.xlu0 %v1257
      %v1289 = vpop.xlane.xlu0 %1288
      %vm1290 = vcmp.eq.f32.partialorder %v681, %v1259
      %vm1291 = vcmp.eq.f32.partialorder %v681, %v1261
      %vm1292 = vcmp.eq.f32.partialorder %v681, %v1263
      %vm1293 = vcmp.eq.f32.partialorder %v681, %v1265
      %vm1294 = vcmp.eq.f32.partialorder %v681, %v1267
      %vm1295 = vcmp.eq.f32.partialorder %v681, %v1269
      %vm1296 = vcmp.eq.f32.partialorder %v681, %v1271
      %vm1297 = vcmp.eq.f32.partialorder %v681, %v1273
      %vm1298 = vcmp.eq.f32.partialorder %v681, %v1275
      %vm1299 = vcmp.eq.f32.partialorder %v681, %v1277
      %vm1300 = vcmp.eq.f32.partialorder %v681, %v1279
      %vm1301 = vcmp.eq.f32.partialorder %v681, %v1281
      %vm1302 = vcmp.eq.f32.partialorder %v681, %v1283
      %vm1303 = vcmp.eq.f32.partialorder %v681, %v1285
      %vm1304 = vcmp.eq.f32.partialorder %v681, %v1287
      %vm1305 = vcmp.eq.f32.partialorder %v681, %v1289
      %v1306 = vsel %vm1290, -inf, %v1178
      %v1307 = vsel %vm1291, -inf, %v1179
      %v1308 = vsel %vm1292, -inf, %v1180
      %v1309 = vsel %vm1293, -inf, %v1181
      %v1310 = vsel %vm1294, -inf, %v1182
      %v1311 = vsel %vm1295, -inf, %v1183
      %v1312 = vsel %vm1296, -inf, %v1184
      %v1313 = vsel %vm1297, -inf, %v1185
      %v1314 = vsel %vm1298, -inf, %v1186
      %v1315 = vsel %vm1299, -inf, %v1187
      %v1316 = vsel %vm1300, -inf, %v1188
      %v1317 = vsel %vm1301, -inf, %v1189
      %v1318 = vsel %vm1302, -inf, %v1190
      %v1319 = vsel %vm1303, -inf, %v1191
      %v1320 = vsel %vm1304, -inf, %v1192
      %v1321 = vsel %vm1305, -inf, %v1193
      %1322 = vmax.xlane.f32.xlu0 %v1306
      %v1323 = vpop.xlane.xlu0 %1322
      %1324 = vmax.xlane.f32.xlu0 %v1307
      %v1325 = vpop.xlane.xlu0 %1324
      %1326 = vmax.xlane.f32.xlu0 %v1308
      %v1327 = vpop.xlane.xlu0 %1326
      %1328 = vmax.xlane.f32.xlu0 %v1309
      %v1329 = vpop.xlane.xlu0 %1328
      %1330 = vmax.xlane.f32.xlu0 %v1310
      %v1331 = vpop.xlane.xlu0 %1330
      %1332 = vmax.xlane.f32.xlu0 %v1311
      %v1333 = vpop.xlane.xlu0 %1332
      %1334 = vmax.xlane.f32.xlu0 %v1312
      %v1335 = vpop.xlane.xlu0 %1334
      %1336 = vmax.xlane.f32.xlu0 %v1313
      %v1337 = vpop.xlane.xlu0 %1336
      %1338 = vmax.xlane.f32.xlu0 %v1314
      %v1339 = vpop.xlane.xlu0 %1338
      %1340 = vmax.xlane.f32.xlu0 %v1315
      %v1341 = vpop.xlane.xlu0 %1340
      %1342 = vmax.xlane.f32.xlu0 %v1316
      %v1343 = vpop.xlane.xlu0 %1342
      %1344 = vmax.xlane.f32.xlu0 %v1317
      %v1345 = vpop.xlane.xlu0 %1344
      %1346 = vmax.xlane.f32.xlu0 %v1318
      %v1347 = vpop.xlane.xlu0 %1346
      %1348 = vmax.xlane.f32.xlu0 %v1319
      %v1349 = vpop.xlane.xlu0 %1348
      %1350 = vmax.xlane.f32.xlu0 %v1320
      %v1351 = vpop.xlane.xlu0 %1350
      %1352 = vmax.xlane.f32.xlu0 %v1321
      %v1353 = vpop.xlane.xlu0 %1352
      %vm1354 = vcmp.ge.f32.partialorder %v1306, %v1323
      %vm1355 = vcmp.ge.f32.partialorder %v1307, %v1325
      %vm1356 = vcmp.ge.f32.partialorder %v1308, %v1327
      %vm1357 = vcmp.ge.f32.partialorder %v1309, %v1329
      %vm1358 = vcmp.ge.f32.partialorder %v1310, %v1331
      %vm1359 = vcmp.ge.f32.partialorder %v1311, %v1333
      %vm1360 = vcmp.ge.f32.partialorder %v1312, %v1335
      %vm1361 = vcmp.ge.f32.partialorder %v1313, %v1337
      %vm1362 = vcmp.ge.f32.partialorder %v1314, %v1339
      %vm1363 = vcmp.ge.f32.partialorder %v1315, %v1341
      %vm1364 = vcmp.ge.f32.partialorder %v1316, %v1343
      %vm1365 = vcmp.ge.f32.partialorder %v1317, %v1345
      %vm1366 = vcmp.ge.f32.partialorder %v1318, %v1347
      %vm1367 = vcmp.ge.f32.partialorder %v1319, %v1349
      %vm1368 = vcmp.ge.f32.partialorder %v1320, %v1351
      %vm1369 = vcmp.ge.f32.partialorder %v1321, %v1353
      %v1370 = vsel %vm1354, %v681, 128.0
      %v1371 = vsel %vm1355, %v681, 128.0
      %v1372 = vsel %vm1356, %v681, 128.0
      %v1373 = vsel %vm1357, %v681, 128.0
      %v1374 = vsel %vm1358, %v681, 128.0
      %v1375 = vsel %vm1359, %v681, 128.0
      %v1376 = vsel %vm1360, %v681, 128.0
      %v1377 = vsel %vm1361, %v681, 128.0
      %v1378 = vsel %vm1362, %v681, 128.0
      %v1379 = vsel %vm1363, %v681, 128.0
      %v1380 = vsel %vm1364, %v681, 128.0
      %v1381 = vsel %vm1365, %v681, 128.0
      %v1382 = vsel %vm1366, %v681, 128.0
      %v1383 = vsel %vm1367, %v681, 128.0
      %v1384 = vsel %vm1368, %v681, 128.0
      %v1385 = vsel %vm1369, %v681, 128.0
      %1386 = vmin.xlane.f32.xlu0 %v1370
      %v1387 = vpop.xlane.xlu0 %1386
      %1388 = vmin.xlane.f32.xlu0 %v1371
      %v1389 = vpop.xlane.xlu0 %1388
      %1390 = vmin.xlane.f32.xlu0 %v1372
      %v1391 = vpop.xlane.xlu0 %1390
      %1392 = vmin.xlane.f32.xlu0 %v1373
      %v1393 = vpop.xlane.xlu0 %1392
      %1394 = vmin.xlane.f32.xlu0 %v1374
      %v1395 = vpop.xlane.xlu0 %1394
      %1396 = vmin.xlane.f32.xlu0 %v1375
      %v1397 = vpop.xlane.xlu0 %1396
      %1398 = vmin.xlane.f32.xlu0 %v1376
      %v1399 = vpop.xlane.xlu0 %1398
      %1400 = vmin.xlane.f32.xlu0 %v1377
      %v1401 = vpop.xlane.xlu0 %1400
      %1402 = vmin.xlane.f32.xlu0 %v1378
      %v1403 = vpop.xlane.xlu0 %1402
      %1404 = vmin.xlane.f32.xlu0 %v1379
      %v1405 = vpop.xlane.xlu0 %1404
      %1406 = vmin.xlane.f32.xlu0 %v1380
      %v1407 = vpop.xlane.xlu0 %1406
      %1408 = vmin.xlane.f32.xlu0 %v1381
      %v1409 = vpop.xlane.xlu0 %1408
      %1410 = vmin.xlane.f32.xlu0 %v1382
      %v1411 = vpop.xlane.xlu0 %1410
      %1412 = vmin.xlane.f32.xlu0 %v1383
      %v1413 = vpop.xlane.xlu0 %1412
      %1414 = vmin.xlane.f32.xlu0 %v1384
      %v1415 = vpop.xlane.xlu0 %1414
      %1416 = vmin.xlane.f32.xlu0 %v1385
      %v1417 = vpop.xlane.xlu0 %1416
      %vm1418 = vcmp.eq.f32.partialorder %v681, %v1387
      %vm1419 = vcmp.eq.f32.partialorder %v681, %v1389
      %vm1420 = vcmp.eq.f32.partialorder %v681, %v1391
      %vm1421 = vcmp.eq.f32.partialorder %v681, %v1393
      %vm1422 = vcmp.eq.f32.partialorder %v681, %v1395
      %vm1423 = vcmp.eq.f32.partialorder %v681, %v1397
      %vm1424 = vcmp.eq.f32.partialorder %v681, %v1399
      %vm1425 = vcmp.eq.f32.partialorder %v681, %v1401
      %vm1426 = vcmp.eq.f32.partialorder %v681, %v1403
      %vm1427 = vcmp.eq.f32.partialorder %v681, %v1405
      %vm1428 = vcmp.eq.f32.partialorder %v681, %v1407
      %vm1429 = vcmp.eq.f32.partialorder %v681, %v1409
      %vm1430 = vcmp.eq.f32.partialorder %v681, %v1411
      %vm1431 = vcmp.eq.f32.partialorder %v681, %v1413
      %vm1432 = vcmp.eq.f32.partialorder %v681, %v1415
      %vm1433 = vcmp.eq.f32.partialorder %v681, %v1417
      %v1434 = vsel %vm1418, -inf, %v1306
      %v1435 = vsel %vm1419, -inf, %v1307
      %v1436 = vsel %vm1420, -inf, %v1308
      %v1437 = vsel %vm1421, -inf, %v1309
      %v1438 = vsel %vm1422, -inf, %v1310
      %v1439 = vsel %vm1423, -inf, %v1311
      %v1440 = vsel %vm1424, -inf, %v1312
      %v1441 = vsel %vm1425, -inf, %v1313
      %v1442 = vsel %vm1426, -inf, %v1314
      %v1443 = vsel %vm1427, -inf, %v1315
      %v1444 = vsel %vm1428, -inf, %v1316
      %v1445 = vsel %vm1429, -inf, %v1317
      %v1446 = vsel %vm1430, -inf, %v1318
      %v1447 = vsel %vm1431, -inf, %v1319
      %v1448 = vsel %vm1432, -inf, %v1320
      %v1449 = vsel %vm1433, -inf, %v1321
      %1450 = vmax.xlane.f32.xlu0 %v1434
      %v1451 = vpop.xlane.xlu0 %1450
      %1452 = vmax.xlane.f32.xlu0 %v1435
      %v1453 = vpop.xlane.xlu0 %1452
      %1454 = vmax.xlane.f32.xlu0 %v1436
      %v1455 = vpop.xlane.xlu0 %1454
      %1456 = vmax.xlane.f32.xlu0 %v1437
      %v1457 = vpop.xlane.xlu0 %1456
      %1458 = vmax.xlane.f32.xlu0 %v1438
      %v1459 = vpop.xlane.xlu0 %1458
      %1460 = vmax.xlane.f32.xlu0 %v1439
      %v1461 = vpop.xlane.xlu0 %1460
      %1462 = vmax.xlane.f32.xlu0 %v1440
      %v1463 = vpop.xlane.xlu0 %1462
      %1464 = vmax.xlane.f32.xlu0 %v1441
      %v1465 = vpop.xlane.xlu0 %1464
      %1466 = vmax.xlane.f32.xlu0 %v1442
      %v1467 = vpop.xlane.xlu0 %1466
      %1468 = vmax.xlane.f32.xlu0 %v1443
      %v1469 = vpop.xlane.xlu0 %1468
      %1470 = vmax.xlane.f32.xlu0 %v1444
      %v1471 = vpop.xlane.xlu0 %1470
      %1472 = vmax.xlane.f32.xlu0 %v1445
      %v1473 = vpop.xlane.xlu0 %1472
      %1474 = vmax.xlane.f32.xlu0 %v1446
      %v1475 = vpop.xlane.xlu0 %1474
      %1476 = vmax.xlane.f32.xlu0 %v1447
      %v1477 = vpop.xlane.xlu0 %1476
      %1478 = vmax.xlane.f32.xlu0 %v1448
      %v1479 = vpop.xlane.xlu0 %1478
      %1480 = vmax.xlane.f32.xlu0 %v1449
      %v1481 = vpop.xlane.xlu0 %1480
      %vm1482 = vcmp.ge.f32.partialorder %v1434, %v1451
      %vm1483 = vcmp.ge.f32.partialorder %v1435, %v1453
      %vm1484 = vcmp.ge.f32.partialorder %v1436, %v1455
      %vm1485 = vcmp.ge.f32.partialorder %v1437, %v1457
      %vm1486 = vcmp.ge.f32.partialorder %v1438, %v1459
      %vm1487 = vcmp.ge.f32.partialorder %v1439, %v1461
      %vm1488 = vcmp.ge.f32.partialorder %v1440, %v1463
      %vm1489 = vcmp.ge.f32.partialorder %v1441, %v1465
      %vm1490 = vcmp.ge.f32.partialorder %v1442, %v1467
      %vm1491 = vcmp.ge.f32.partialorder %v1443, %v1469
      %vm1492 = vcmp.ge.f32.partialorder %v1444, %v1471
      %vm1493 = vcmp.ge.f32.partialorder %v1445, %v1473
      %vm1494 = vcmp.ge.f32.partialorder %v1446, %v1475
      %vm1495 = vcmp.ge.f32.partialorder %v1447, %v1477
      %vm1496 = vcmp.ge.f32.partialorder %v1448, %v1479
      %vm1497 = vcmp.ge.f32.partialorder %v1449, %v1481
      %v1498 = vsel %vm1482, %v681, 128.0
      %v1499 = vsel %vm1483, %v681, 128.0
      %v1500 = vsel %vm1484, %v681, 128.0
      %v1501 = vsel %vm1485, %v681, 128.0
      %v1502 = vsel %vm1486, %v681, 128.0
      %v1503 = vsel %vm1487, %v681, 128.0
      %v1504 = vsel %vm1488, %v681, 128.0
      %v1505 = vsel %vm1489, %v681, 128.0
      %v1506 = vsel %vm1490, %v681, 128.0
      %v1507 = vsel %vm1491, %v681, 128.0
      %v1508 = vsel %vm1492, %v681, 128.0
      %v1509 = vsel %vm1493, %v681, 128.0
      %v1510 = vsel %vm1494, %v681, 128.0
      %v1511 = vsel %vm1495, %v681, 128.0
      %v1512 = vsel %vm1496, %v681, 128.0
      %v1513 = vsel %vm1497, %v681, 128.0
      %1514 = vmin.xlane.f32.xlu0 %v1498
      %v1515 = vpop.xlane.xlu0 %1514
      %1516 = vmin.xlane.f32.xlu0 %v1499
      %v1517 = vpop.xlane.xlu0 %1516
      %1518 = vmin.xlane.f32.xlu0 %v1500
      %v1519 = vpop.xlane.xlu0 %1518
      %1520 = vmin.xlane.f32.xlu0 %v1501
      %v1521 = vpop.xlane.xlu0 %1520
      %1522 = vmin.xlane.f32.xlu0 %v1502
      %v1523 = vpop.xlane.xlu0 %1522
      %1524 = vmin.xlane.f32.xlu0 %v1503
      %v1525 = vpop.xlane.xlu0 %1524
      %1526 = vmin.xlane.f32.xlu0 %v1504
      %v1527 = vpop.xlane.xlu0 %1526
      %1528 = vmin.xlane.f32.xlu0 %v1505
      %v1529 = vpop.xlane.xlu0 %1528
      %1530 = vmin.xlane.f32.xlu0 %v1506
      %v1531 = vpop.xlane.xlu0 %1530
      %1532 = vmin.xlane.f32.xlu0 %v1507
      %v1533 = vpop.xlane.xlu0 %1532
      %1534 = vmin.xlane.f32.xlu0 %v1508
      %v1535 = vpop.xlane.xlu0 %1534
      %1536 = vmin.xlane.f32.xlu0 %v1509
      %v1537 = vpop.xlane.xlu0 %1536
      %1538 = vmin.xlane.f32.xlu0 %v1510
      %v1539 = vpop.xlane.xlu0 %1538
      %1540 = vmin.xlane.f32.xlu0 %v1511
      %v1541 = vpop.xlane.xlu0 %1540
      %1542 = vmin.xlane.f32.xlu0 %v1512
      %v1543 = vpop.xlane.xlu0 %1542
      %1544 = vmin.xlane.f32.xlu0 %v1513
      %v1545 = vpop.xlane.xlu0 %1544
      %vm1546 = vcmp.eq.f32.partialorder %v681, %v1515
      %vm1547 = vcmp.eq.f32.partialorder %v681, %v1517
      %vm1548 = vcmp.eq.f32.partialorder %v681, %v1519
      %vm1549 = vcmp.eq.f32.partialorder %v681, %v1521
      %vm1550 = vcmp.eq.f32.partialorder %v681, %v1523
      %vm1551 = vcmp.eq.f32.partialorder %v681, %v1525
      %vm1552 = vcmp.eq.f32.partialorder %v681, %v1527
      %vm1553 = vcmp.eq.f32.partialorder %v681, %v1529
      %vm1554 = vcmp.eq.f32.partialorder %v681, %v1531
      %vm1555 = vcmp.eq.f32.partialorder %v681, %v1533
      %vm1556 = vcmp.eq.f32.partialorder %v681, %v1535
      %vm1557 = vcmp.eq.f32.partialorder %v681, %v1537
      %vm1558 = vcmp.eq.f32.partialorder %v681, %v1539
      %vm1559 = vcmp.eq.f32.partialorder %v681, %v1541
      %vm1560 = vcmp.eq.f32.partialorder %v681, %v1543
      %vm1561 = vcmp.eq.f32.partialorder %v681, %v1545
      %v1562 = vsel %vm1546, -inf, %v1434
      %v1563 = vsel %vm1547, -inf, %v1435
      %v1564 = vsel %vm1548, -inf, %v1436
      %v1565 = vsel %vm1549, -inf, %v1437
      %v1566 = vsel %vm1550, -inf, %v1438
      %v1567 = vsel %vm1551, -inf, %v1439
      %v1568 = vsel %vm1552, -inf, %v1440
      %v1569 = vsel %vm1553, -inf, %v1441
      %v1570 = vsel %vm1554, -inf, %v1442
      %v1571 = vsel %vm1555, -inf, %v1443
      %v1572 = vsel %vm1556, -inf, %v1444
      %v1573 = vsel %vm1557, -inf, %v1445
      %v1574 = vsel %vm1558, -inf, %v1446
      %v1575 = vsel %vm1559, -inf, %v1447
      %v1576 = vsel %vm1560, -inf, %v1448
      %v1577 = vsel %vm1561, -inf, %v1449
      %1578 = vmax.xlane.f32.xlu0 %v1562
      %v1579 = vpop.xlane.xlu0 %1578
      %1580 = vmax.xlane.f32.xlu0 %v1563
      %v1581 = vpop.xlane.xlu0 %1580
      %1582 = vmax.xlane.f32.xlu0 %v1564
      %v1583 = vpop.xlane.xlu0 %1582
      %1584 = vmax.xlane.f32.xlu0 %v1565
      %v1585 = vpop.xlane.xlu0 %1584
      %1586 = vmax.xlane.f32.xlu0 %v1566
      %v1587 = vpop.xlane.xlu0 %1586
      %1588 = vmax.xlane.f32.xlu0 %v1567
      %v1589 = vpop.xlane.xlu0 %1588
      %1590 = vmax.xlane.f32.xlu0 %v1568
      %v1591 = vpop.xlane.xlu0 %1590
      %1592 = vmax.xlane.f32.xlu0 %v1569
      %v1593 = vpop.xlane.xlu0 %1592
      %1594 = vmax.xlane.f32.xlu0 %v1570
      %v1595 = vpop.xlane.xlu0 %1594
      %1596 = vmax.xlane.f32.xlu0 %v1571
      %v1597 = vpop.xlane.xlu0 %1596
      %1598 = vmax.xlane.f32.xlu0 %v1572
      %v1599 = vpop.xlane.xlu0 %1598
      %1600 = vmax.xlane.f32.xlu0 %v1573
      %v1601 = vpop.xlane.xlu0 %1600
      %1602 = vmax.xlane.f32.xlu0 %v1574
      %v1603 = vpop.xlane.xlu0 %1602
      %1604 = vmax.xlane.f32.xlu0 %v1575
      %v1605 = vpop.xlane.xlu0 %1604
      %1606 = vmax.xlane.f32.xlu0 %v1576
      %v1607 = vpop.xlane.xlu0 %1606
      %1608 = vmax.xlane.f32.xlu0 %v1577
      %v1609 = vpop.xlane.xlu0 %1608
      %vm1610 = vcmp.ge.f32.partialorder %v1562, %v1579
      %vm1611 = vcmp.ge.f32.partialorder %v1563, %v1581
      %vm1612 = vcmp.ge.f32.partialorder %v1564, %v1583
      %vm1613 = vcmp.ge.f32.partialorder %v1565, %v1585
      %vm1614 = vcmp.ge.f32.partialorder %v1566, %v1587
      %vm1615 = vcmp.ge.f32.partialorder %v1567, %v1589
      %vm1616 = vcmp.ge.f32.partialorder %v1568, %v1591
      %vm1617 = vcmp.ge.f32.partialorder %v1569, %v1593
      %vm1618 = vcmp.ge.f32.partialorder %v1570, %v1595
      %vm1619 = vcmp.ge.f32.partialorder %v1571, %v1597
      %vm1620 = vcmp.ge.f32.partialorder %v1572, %v1599
      %vm1621 = vcmp.ge.f32.partialorder %v1573, %v1601
      %vm1622 = vcmp.ge.f32.partialorder %v1574, %v1603
      %vm1623 = vcmp.ge.f32.partialorder %v1575, %v1605
      %vm1624 = vcmp.ge.f32.partialorder %v1576, %v1607
      %vm1625 = vcmp.ge.f32.partialorder %v1577, %v1609
      %v1626 = vsel %vm1610, %v681, 128.0
      %v1627 = vsel %vm1611, %v681, 128.0
      %v1628 = vsel %vm1612, %v681, 128.0
      %v1629 = vsel %vm1613, %v681, 128.0
      %v1630 = vsel %vm1614, %v681, 128.0
      %v1631 = vsel %vm1615, %v681, 128.0
      %v1632 = vsel %vm1616, %v681, 128.0
      %v1633 = vsel %vm1617, %v681, 128.0
      %v1634 = vsel %vm1618, %v681, 128.0
      %v1635 = vsel %vm1619, %v681, 128.0
      %v1636 = vsel %vm1620, %v681, 128.0
      %v1637 = vsel %vm1621, %v681, 128.0
      %v1638 = vsel %vm1622, %v681, 128.0
      %v1639 = vsel %vm1623, %v681, 128.0
      %v1640 = vsel %vm1624, %v681, 128.0
      %v1641 = vsel %vm1625, %v681, 128.0
      %1642 = vmin.xlane.f32.xlu0 %v1626
      %v1643 = vpop.xlane.xlu0 %1642
      %1644 = vmin.xlane.f32.xlu0 %v1627
      %v1645 = vpop.xlane.xlu0 %1644
      %1646 = vmin.xlane.f32.xlu0 %v1628
      %v1647 = vpop.xlane.xlu0 %1646
      %1648 = vmin.xlane.f32.xlu0 %v1629
      %v1649 = vpop.xlane.xlu0 %1648
      %1650 = vmin.xlane.f32.xlu0 %v1630
      %v1651 = vpop.xlane.xlu0 %1650
      %1652 = vmin.xlane.f32.xlu0 %v1631
      %v1653 = vpop.xlane.xlu0 %1652
      %1654 = vmin.xlane.f32.xlu0 %v1632
      %v1655 = vpop.xlane.xlu0 %1654
      %1656 = vmin.xlane.f32.xlu0 %v1633
      %v1657 = vpop.xlane.xlu0 %1656
      %1658 = vmin.xlane.f32.xlu0 %v1634
      %v1659 = vpop.xlane.xlu0 %1658
      %1660 = vmin.xlane.f32.xlu0 %v1635
      %v1661 = vpop.xlane.xlu0 %1660
      %1662 = vmin.xlane.f32.xlu0 %v1636
      %v1663 = vpop.xlane.xlu0 %1662
      %1664 = vmin.xlane.f32.xlu0 %v1637
      %v1665 = vpop.xlane.xlu0 %1664
      %1666 = vmin.xlane.f32.xlu0 %v1638
      %v1667 = vpop.xlane.xlu0 %1666
      %1668 = vmin.xlane.f32.xlu0 %v1639
      %v1669 = vpop.xlane.xlu0 %1668
      %1670 = vmin.xlane.f32.xlu0 %v1640
      %v1671 = vpop.xlane.xlu0 %1670
      %1672 = vmin.xlane.f32.xlu0 %v1641
      %v1673 = vpop.xlane.xlu0 %1672
      %vm1674 = vcmask 7168
      %v1675 = vsel %vm1674, %v747, %v875
      %v1676 = vsel %vm1674, %v749, %v877
      %v1677 = vsel %vm1674, %v751, %v879
      %v1678 = vsel %vm1674, %v753, %v881
      %v1679 = vsel %vm1674, %v755, %v883
      %v1680 = vsel %vm1674, %v757, %v885
      %v1681 = vsel %vm1674, %v759, %v887
      %v1682 = vsel %vm1674, %v761, %v889
      %v1683 = vsel %vm1674, %v763, %v891
      %v1684 = vsel %vm1674, %v765, %v893
      %v1685 = vsel %vm1674, %v767, %v895
      %v1686 = vsel %vm1674, %v769, %v897
      %v1687 = vsel %vm1674, %v771, %v899
      %v1688 = vsel %vm1674, %v773, %v901
      %v1689 = vsel %vm1674, %v775, %v903
      %v1690 = vsel %vm1674, %v777, %v905
      %vm1691 = vcmask 15360
      %v1692 = vsel %vm1691, %v1675, %v1003
      %v1693 = vsel %vm1691, %v1676, %v1005
      %v1694 = vsel %vm1691, %v1677, %v1007
      %v1695 = vsel %vm1691, %v1678, %v1009
      %v1696 = vsel %vm1691, %v1679, %v1011
      %v1697 = vsel %vm1691, %v1680, %v1013
      %v1698 = vsel %vm1691, %v1681, %v1015
      %v1699 = vsel %vm1691, %v1682, %v1017
      %v1700 = vsel %vm1691, %v1683, %v1019
      %v1701 = vsel %vm1691, %v1684, %v1021
      %v1702 = vsel %vm1691, %v1685, %v1023
      %v1703 = vsel %vm1691, %v1686, %v1025
      %v1704 = vsel %vm1691, %v1687, %v1027
      %v1705 = vsel %vm1691, %v1688, %v1029
      %v1706 = vsel %vm1691, %v1689, %v1031
      %v1707 = vsel %vm1691, %v1690, %v1033
      %v1708 = vsel %vm330, %v1692, %v1131
      %v1709 = vsel %vm330, %v1693, %v1133
      %v1710 = vsel %vm330, %v1694, %v1135
      %v1711 = vsel %vm330, %v1695, %v1137
      %v1712 = vsel %vm330, %v1696, %v1139
      %v1713 = vsel %vm330, %v1697, %v1141
      %v1714 = vsel %vm330, %v1698, %v1143
      %v1715 = vsel %vm330, %v1699, %v1145
      %v1716 = vsel %vm330, %v1700, %v1147
      %v1717 = vsel %vm330, %v1701, %v1149
      %v1718 = vsel %vm330, %v1702, %v1151
      %v1719 = vsel %vm330, %v1703, %v1153
      %v1720 = vsel %vm330, %v1704, %v1155
      %v1721 = vsel %vm330, %v1705, %v1157
      %v1722 = vsel %vm330, %v1706, %v1159
      %v1723 = vsel %vm330, %v1707, %v1161
      %vm1724 = vcmask 31744
      %v1725 = vsel %vm1724, %v1708, %v1259
      %v1726 = vsel %vm1724, %v1709, %v1261
      %v1727 = vsel %vm1724, %v1710, %v1263
      %v1728 = vsel %vm1724, %v1711, %v1265
      %v1729 = vsel %vm1724, %v1712, %v1267
      %v1730 = vsel %vm1724, %v1713, %v1269
      %v1731 = vsel %vm1724, %v1714, %v1271
      %v1732 = vsel %vm1724, %v1715, %v1273
      %v1733 = vsel %vm1724, %v1716, %v1275
      %v1734 = vsel %vm1724, %v1717, %v1277
      %v1735 = vsel %vm1724, %v1718, %v1279
      %v1736 = vsel %vm1724, %v1719, %v1281
      %v1737 = vsel %vm1724, %v1720, %v1283
      %v1738 = vsel %vm1724, %v1721, %v1285
      %v1739 = vsel %vm1724, %v1722, %v1287
      %v1740 = vsel %vm1724, %v1723, %v1289
      %vm1741 = vcmask 39936
      %v1742 = vsel %vm1741, %v1725, %v1387
      %v1743 = vsel %vm1741, %v1726, %v1389
      %v1744 = vsel %vm1741, %v1727, %v1391
      %v1745 = vsel %vm1741, %v1728, %v1393
      %v1746 = vsel %vm1741, %v1729, %v1395
      %v1747 = vsel %vm1741, %v1730, %v1397
      %v1748 = vsel %vm1741, %v1731, %v1399
      %v1749 = vsel %vm1741, %v1732, %v1401
      %v1750 = vsel %vm1741, %v1733, %v1403
      %v1751 = vsel %vm1741, %v1734, %v1405
      %v1752 = vsel %vm1741, %v1735, %v1407
      %v1753 = vsel %vm1741, %v1736, %v1409
      %v1754 = vsel %vm1741, %v1737, %v1411
      %v1755 = vsel %vm1741, %v1738, %v1413
      %v1756 = vsel %vm1741, %v1739, %v1415
      %v1757 = vsel %vm1741, %v1740, %v1417
      %vm1758 = vcmask 48128
      %v1759 = vsel %vm1758, %v1742, %v1515
      %v1760 = vsel %vm1758, %v1743, %v1517
      %v1761 = vsel %vm1758, %v1744, %v1519
      %v1762 = vsel %vm1758, %v1745, %v1521
      %v1763 = vsel %vm1758, %v1746, %v1523
      %v1764 = vsel %vm1758, %v1747, %v1525
      %v1765 = vsel %vm1758, %v1748, %v1527
      %v1766 = vsel %vm1758, %v1749, %v1529
      %v1767 = vsel %vm1758, %v1750, %v1531
      %v1768 = vsel %vm1758, %v1751, %v1533
      %v1769 = vsel %vm1758, %v1752, %v1535
      %v1770 = vsel %vm1758, %v1753, %v1537
      %v1771 = vsel %vm1758, %v1754, %v1539
      %v1772 = vsel %vm1758, %v1755, %v1541
      %v1773 = vsel %vm1758, %v1756, %v1543
      %v1774 = vsel %vm1758, %v1757, %v1545
      %vm1775 = vcmask 56320
      %v1776 = vsel %vm1775, %v1759, %v1643
      %v1777 = vsel %vm1775, %v1760, %v1645
      %v1778 = vsel %vm1775, %v1761, %v1647
      %v1779 = vsel %vm1775, %v1762, %v1649
      %v1780 = vsel %vm1775, %v1763, %v1651
      %v1781 = vsel %vm1775, %v1764, %v1653
      %v1782 = vsel %vm1775, %v1765, %v1655
      %v1783 = vsel %vm1775, %v1766, %v1657
      %v1784 = vsel %vm1775, %v1767, %v1659
      %v1785 = vsel %vm1775, %v1768, %v1661
      %v1786 = vsel %vm1775, %v1769, %v1663
      %v1787 = vsel %vm1775, %v1770, %v1665
      %v1788 = vsel %vm1775, %v1771, %v1667
      %v1789 = vsel %vm1775, %v1772, %v1669
      %v1790 = vsel %vm1775, %v1773, %v1671
      %v1791 = vsel %vm1775, %v1774, %v1673
      %v1792 = vcvt.f32.s32.to.zero.pseudo %v1776
      %v1793 = vcvt.f32.s32.to.zero.pseudo %v1777
      %v1794 = vcvt.f32.s32.to.zero.pseudo %v1778
      %v1795 = vcvt.f32.s32.to.zero.pseudo %v1779
      %v1796 = vcvt.f32.s32.to.zero.pseudo %v1780
      %v1797 = vcvt.f32.s32.to.zero.pseudo %v1781
      %v1798 = vcvt.f32.s32.to.zero.pseudo %v1782
      %v1799 = vcvt.f32.s32.to.zero.pseudo %v1783
      %v1800 = vcvt.f32.s32.to.zero.pseudo %v1784
      %v1801 = vcvt.f32.s32.to.zero.pseudo %v1785
      %v1802 = vcvt.f32.s32.to.zero.pseudo %v1786
      %v1803 = vcvt.f32.s32.to.zero.pseudo %v1787
      %v1804 = vcvt.f32.s32.to.zero.pseudo %v1788
      %v1805 = vcvt.f32.s32.to.zero.pseudo %v1789
      %v1806 = vcvt.f32.s32.to.zero.pseudo %v1790
      %v1807 = vcvt.f32.s32.to.zero.pseudo %v1791
      %vm1808 = vcmask 64512
      %1809 = vst.msk [vmem:[%s294] sm:$0xff] %vm1808, %v1792
      %1810 = vst.msk [vmem:[%s294 + $0x8] sm:$0xff] %vm1808, %v1793
      %1811 = vst.msk [vmem:[%s294 + $0x10] sm:$0xff] %vm1808, %v1794
      %1812 = vst.msk [vmem:[%s294 + $0x18] sm:$0xff] %vm1808, %v1795
      %1813 = vst.msk [vmem:[%s294 + $0x20] sm:$0xff] %vm1808, %v1796
      %1814 = vst.msk [vmem:[%s294 + $0x28] sm:$0xff] %vm1808, %v1797
      %1815 = vst.msk [vmem:[%s294 + $0x30] sm:$0xff] %vm1808, %v1798
      %1816 = vst.msk [vmem:[%s294 + $0x38] sm:$0xff] %vm1808, %v1799
      %1817 = vst.msk [vmem:[%s294 + $0x40] sm:$0xff] %vm1808, %v1800
      %1818 = vst.msk [vmem:[%s294 + $0x48] sm:$0xff] %vm1808, %v1801
      %1819 = vst.msk [vmem:[%s294 + $0x50] sm:$0xff] %vm1808, %v1802
      %1820 = vst.msk [vmem:[%s294 + $0x58] sm:$0xff] %vm1808, %v1803
      %1821 = vst.msk [vmem:[%s294 + $0x60] sm:$0xff] %vm1808, %v1804
      %1822 = vst.msk [vmem:[%s294 + $0x68] sm:$0xff] %vm1808, %v1805
      %1823 = vst.msk [vmem:[%s294 + $0x70] sm:$0xff] %vm1808, %v1806
      %1824 = vst.msk [vmem:[%s294 + $0x78] sm:$0xff] %vm1808, %v1807
      %s1825 = smul.u32 16, %s20
      %p1826 = scmp.lt.s32.totalorder %s19, 1
      %s1827 = scalar_select %p1826, %s19, 1
      %p1828 = scmp.lt.s32.totalorder %s1825, 15
      %s1829 = scalar_select %p1828, %s1825, 15
      %s1830 = smul.addr %s1827, 16
      %s1831 = sadd.s32 %s1829, %s1830
      %s1832 = smul.addr %s1831, 8
      %s1833 = scalar_lea.vmem %s4, %s1832
      // Predicated region
      $region37: #{tpu_custom_call.1} parent=35 // pred_check
        %p1834 = pneg %p155
      $region38: #{tpu_custom_call.1} parent=35 // pred_check_branch
        %1836 = sbr.rel (%p1834) target = $region40
      $region39: #{tpu_custom_call.1} parent=35 // pred_region
        %s1837 = smul.u32 16, %s20
      $region40: #{tpu_custom_call.1} parent=35 // pred_fallthru
        _
    $region36: #{tpu_custom_call.1} parent=5 // pred_fallthru
      _
    %p1838 = scmp.le.s32.totalorder 2, %s10
    // Predicated region
    $region41: #{tpu_custom_call.1} parent=5 // pred_check
      %p1839 = pneg %p1838
    $region42: #{tpu_custom_call.1} parent=5 // pred_check_branch
      %1841 = sbr.rel (%p1839) target = $region44
    $region43: #{tpu_custom_call.1} parent=5 // pred_region
      %s1842 = ssub.s32 %s10, 2
      // Predicated region
      $region45: #{tpu_custom_call.1} parent=43 // pred_check
        %p1843 = pneg %p161
      $region46: #{tpu_custom_call.1} parent=43 // pred_check_branch
        %1845 = sbr.rel (%p1843) target = $region48
      $region47: #{tpu_custom_call.1} parent=43 // pred_region
        %s1846 = smul.u32 16, %s22
        %p1847 = scmp.lt.s32.totalorder %s21, 1
        %s1848 = scalar_select %p1847, %s21, 1
        %p1849 = scmp.lt.s32.totalorder %s1846, 15
        %s1850 = scalar_select %p1849, %s1846, 15
        %s1851 = smul.addr %s1848, 16
        %s1852 = sadd.s32 %s1850, %s1851
        %s1853 = smul.addr %s1852, 8
        %s1854 = scalar_lea.vmem %s4, %s1853
      $region48: #{tpu_custom_call.1} parent=43 // pred_fallthru
        _
    $region44: #{tpu_custom_call.1} parent=5 // pred_fallthru
      _
  $region6: #{tpu_custom_call.1} parent=0 // loop_footer
    %s14 = sadd.s32 1, %s10
  $region7: #{tpu_custom_call.1} parent=0 // loop_footer_branch
    %9 = sbr.rel target = $region3
  $region8: #{tpu_custom_call.1} parent=0 // loop_exit
    _

</llo_original>
